<compile_context>
chip_gen: v6e
topology: v6e:2x2x1
jax: 0.10.0
libtpu: 0.0.40
codegen_flags: <defaults>
</compile_context>

<pallas_src>
import functools

import jax
import jax.numpy as jnp
from jax.experimental import pallas as pl
from jax.experimental.pallas import tpu as pltpu

EPS = 1e-5  # PyTorch BatchNorm1d default eps

# Batch-tile cap (rows). Sweepable: ~512 on v5e (slower MXU, single vst slot),
# 1024-2048 on v6e/v7x. 1024 keeps total VMEM (~6-8 MiB at TM=1024) well inside the
# 32 MiB scoped default on all generations.
TM_CAP = 1024


def _round_up(n, m):
    return ((n + m - 1) // m) * m


def mlp_kernel(x_ref, w1, w2, w3, w4, w5, b_ref, out_ref, *, bias_slices):
    """Fused MLP forward for one batch tile. BN already folded into W/b on the host."""

    def layer(h, w_ref, sl, relu):
        start, size = sl
        b = b_ref[:, start:start + size]   # static, lane-aligned slice of f32 bias pack
        y = jnp.dot(h, w_ref[...], preferred_element_type=jnp.float32) + b
        # ReLU in f32, then carry the activation as bf16: halves inter-layer spill /
        # vst traffic; the bf16 cast is needed for the next MXU matmul anyway.
        return jnp.maximum(y, 0.0).astype(jnp.bfloat16) if relu else y

    h = x_ref[...]                          # already bf16 (cast on the host)
    # TODO(synk): training-mode dropout (pltpu.prng_random_bits mask) not implemented.
    h = layer(h, w1, bias_slices[0], True)
    h = layer(h, w2, bias_slices[1], True)
    h = layer(h, w3, bias_slices[2], True)
    h = layer(h, w4, bias_slices[3], True)
    out_ref[...] = layer(h, w5, bias_slices[4], False)   # logits, f32


def init_params(key, dims):
    """Deterministic synthetic parameters. dims = [90, 512, 256, 128, 64, 4]."""
    params = []
    for i in range(len(dims) - 1):
        din, dout = dims[i], dims[i + 1]
        key, kw, kb, kg, kbe, krm, krv = jax.random.split(key, 7)
        w = jax.random.normal(kw, (din, dout), jnp.float32) * (1.0 / jnp.sqrt(din))
        b = jax.random.normal(kb, (dout,), jnp.float32) * 0.02
        layer = {"w": w, "b": b}
        if i < len(dims) - 2:  # hidden layers have BatchNorm
            layer["gamma"] = 1.0 + 0.1 * jax.random.normal(kg, (dout,), jnp.float32)
            layer["beta"] = 0.1 * jax.random.normal(kbe, (dout,), jnp.float32)
            layer["rmean"] = 0.1 * jax.random.normal(krm, (dout,), jnp.float32)
            layer["rvar"] = jnp.abs(jax.random.normal(krv, (dout,), jnp.float32)) + 0.5
        params.append(layer)
    return params


def _fold_bn(layer):
    """Fold eval-mode BatchNorm1d into the preceding Linear. Returns (W', b') in f32."""
    if "gamma" in layer:
        scale = layer["gamma"] * jax.lax.rsqrt(layer["rvar"] + EPS)
        w = layer["w"] * scale[None, :]
        b = (layer["b"] - layer["rmean"]) * scale + layer["beta"]
        return w, b
    return layer["w"], layer["b"]


def _pad2(a, rows, cols):
    return jnp.zeros((rows, cols), a.dtype).at[: a.shape[0], : a.shape[1]].set(a)


def _pad_row(v, cols):
    return jnp.zeros((cols,), v.dtype).at[: v.shape[0]].set(v)


def _pick_batch_tiling(B):
    """Choose (Bp, TM, grid) for batch B with bf16 inputs (16-row granularity)."""
    Bp0 = max(16, _round_up(B, 16))          # bf16 (16,128) tile constraint
    if Bp0 > TM_CAP:
        TM = TM_CAP
    elif Bp0 >= 512:
        # >= 2 "parallel" grid steps so v7x's second TensorCore gets work; multiples of
        # 256 keep the v6e/v7x 256-wide MXU fully occupied on the M axis.
        TM = _round_up(-(-Bp0 // 2), 256)
    else:
        TM = Bp0
    Bp = _round_up(Bp0, TM)
    return Bp, TM, (Bp // TM,)


def mlp_forward_pallas(x, params, dims):
    B, D_in = x.shape
    assert D_in == dims[0]
    dims_p = [_round_up(d, 128) for d in dims]
    Bp, TM, grid = _pick_batch_tiling(B)

    # Pad input (zeros in padded lanes/rows) and cast to bf16 on the host.
    xp = (jnp.zeros((Bp, dims_p[0]), jnp.float32)
          .at[:B, :D_in].set(x)
          .astype(jnp.bfloat16))

    # Host-side: fold BN, pad, cast weights to bf16, pack all bias rows into one f32 row.
    weights, bias_rows, bias_slices = [], [], []
    off = 0
    for i, layer in enumerate(params):
        w, b = _fold_bn(layer)
        dinp, doutp = dims_p[i], dims_p[i + 1]
        weights.append(_pad2(w, dinp, doutp).astype(jnp.bfloat16))
        bias_rows.append(_pad_row(b, doutp))          # padded lanes stay exactly 0
        bias_slices.append((off, doutp))
        off += doutp
    bias_pack = jnp.concatenate(bias_rows)[None, :]   # (1, total_bias), f32
    total_bias = off

    flops = 2 * Bp * sum(dims_p[i] * dims_p[i + 1] for i in range(len(dims_p) - 1))
    bytes_accessed = (xp.size * 2 + Bp * dims_p[-1] * 4 + bias_pack.size * 4
                      + sum(int(w.size) * 2 for w in weights))

    kernel = functools.partial(mlp_kernel, bias_slices=tuple(bias_slices))

    def build_call(resident_mode):
        # Weights/bias are grid-invariant (same block every step): single-buffer them.
        w_specs = [pl.BlockSpec((dims_p[i], dims_p[i + 1]), lambda m: (0, 0),
                                pipeline_mode=resident_mode)
                   for i in range(len(params))]
        in_specs = ([pl.BlockSpec((TM, dims_p[0]), lambda m: (m, 0))]
                    + w_specs
                    + [pl.BlockSpec((1, total_bias), lambda m: (0, 0),
                                    pipeline_mode=resident_mode)])
        out_spec = pl.BlockSpec((TM, dims_p[-1]), lambda m: (m, 0))
        return pl.pallas_call(
            kernel,
            out_shape=jax.ShapeDtypeStruct((Bp, dims_p[-1]), jnp.float32),
            grid_spec=pltpu.PrefetchScalarGridSpec(
                num_scalar_prefetch=0,
                grid=grid,
                in_specs=in_specs,
                out_specs=out_spec),
            compiler_params=pltpu.CompilerParams(dimension_semantics=("parallel",)),
            cost_estimate=pl.CostEstimate(flops=flops, transcendentals=0,
                                          bytes_accessed=bytes_accessed),
        )

    try:
        out_p = build_call(pl.Buffered(1))(xp, *weights, bias_pack)
    except Exception:
        # Fallback: default (double) buffering if this JAX rejects buffer_count=1.
        out_p = build_call(None)(xp, *weights, bias_pack)

    return out_p[:B, : dims[-1]]


def mlp_forward_ref(x, params):
    """Plain-JAX reference with the same numerics as the kernel:
    eval-mode BN folded into Linear, bf16 weights/activations, f32 accumulation."""
    h = x.astype(jnp.bfloat16)
    for layer in params:
        w, b = _fold_bn(layer)
        y = jnp.dot(h, w.astype(jnp.bfloat16), preferred_element_type=jnp.float32) + b
        h = jnp.maximum(y, 0.0).astype(jnp.bfloat16) if "gamma" in layer else y
    return h


if __name__ == "__main__":
    dims = [90, 512, 256, 128, 64, 4]  # input_dim=90, num_classes=4
    key = jax.random.PRNGKey(0)
    kx, kp = jax.random.split(key)

    batch = 2
    x = jax.random.normal(kx, (batch, dims[0]), jnp.float32)
    params = init_params(kp, dims)

    out = mlp_forward_pallas(x, params, dims)
    out = jax.block_until_ready(out)

    ref = mlp_forward_ref(x, params)
    assert out.shape == (batch, dims[-1]), out.shape
    assert jnp.allclose(out, ref, atol=2e-3, rtol=2e-3), (out, ref)

    print("KERNEL_OK")
</pallas_src>

<mosaic_0001>
module attributes {stable_mosaic.version = 11 : i64} {
  func.func @mlp_kernel(%arg0: i32, %arg1: memref<16x128xbf16, #tpu.memory_space<vmem>>, %arg2: memref<128x512xbf16, #tpu.memory_space<vmem>>, %arg3: memref<512x256xbf16, #tpu.memory_space<vmem>>, %arg4: memref<256x128xbf16, #tpu.memory_space<vmem>>, %arg5: memref<128x128xbf16, #tpu.memory_space<vmem>>, %arg6: memref<128x128xbf16, #tpu.memory_space<vmem>>, %arg7: memref<1x1152xf32, #tpu.memory_space<vmem>>, %arg8: memref<16x128xf32, #tpu.memory_space<vmem>>) attributes {dimension_semantics = [#tpu.dimension_semantics<parallel>], iteration_bounds = array<i64: 1>, scalar_prefetch = 0 : i64, scratch_operands = 0 : i64, tpu.core_type = #tpu.core_type<tc>, window_params = [{transform_indices = @transform_0, window_bounds = array<i64: 16, 128>}, {pipeline_mode = #tpu.pipeline_mode<synchronous>, transform_indices = @transform_1, window_bounds = array<i64: 128, 512>}, {pipeline_mode = #tpu.pipeline_mode<synchronous>, transform_indices = @transform_2, window_bounds = array<i64: 512, 256>}, {pipeline_mode = #tpu.pipeline_mode<synchronous>, transform_indices = @transform_3, window_bounds = array<i64: 256, 128>}, {pipeline_mode = #tpu.pipeline_mode<synchronous>, transform_indices = @transform_4, window_bounds = array<i64: 128, 128>}, {pipeline_mode = #tpu.pipeline_mode<synchronous>, transform_indices = @transform_5, window_bounds = array<i64: 128, 128>}, {pipeline_mode = #tpu.pipeline_mode<synchronous>, transform_indices = @transform_6, window_bounds = array<i64: 1, 1152>}, {transform_indices = @transform_7, window_bounds = array<i64: 16, 128>}]} {
    %c0 = arith.constant 0 : index
    %c0_0 = arith.constant 0 : index
    %0 = vector.load %arg1[%c0, %c0_0] : memref<16x128xbf16, #tpu.memory_space<vmem>>, vector<16x128xbf16>
    %c0_1 = arith.constant 0 : index
    %c0_2 = arith.constant 0 : index
    %1 = vector.load %arg7[%c0_1, %c0_2] : memref<1x1152xf32, #tpu.memory_space<vmem>>, vector<1x512xf32>
    %c0_3 = arith.constant 0 : index
    %c0_4 = arith.constant 0 : index
    %2 = vector.load %arg2[%c0_3, %c0_4] : memref<128x512xbf16, #tpu.memory_space<vmem>>, vector<128x512xbf16>
    %cst = arith.constant dense<0.000000e+00> : vector<16x512xf32>
    %3 = tpu.matmul %0, %2, %cst {dimension_numbers = #tpu.dot_dimension_numbers<[1], [0], [0], [1], [0, 0, 1, 1], [], []>} : vector<16x128xbf16>, vector<128x512xbf16>, vector<16x512xf32> -> vector<16x512xf32>
    %4 = vector.broadcast %1 : vector<1x512xf32> to vector<16x512xf32>
    %5 = arith.addf %3, %4 : vector<16x512xf32>
    %cst_5 = arith.constant 0.000000e+00 : f32
    %6 = vector.broadcast %cst_5 : f32 to vector<16x512xf32>
    %7 = arith.maximumf %5, %6 : vector<16x512xf32>
    %8 = arith.truncf %7 : vector<16x512xf32> to vector<16x512xbf16>
    %c0_6 = arith.constant 0 : index
    %c512 = arith.constant 512 : index
    %9 = vector.load %arg7[%c0_6, %c512] : memref<1x1152xf32, #tpu.memory_space<vmem>>, vector<1x256xf32>
    %c0_7 = arith.constant 0 : index
    %c0_8 = arith.constant 0 : index
    %10 = vector.load %arg3[%c0_7, %c0_8] : memref<512x256xbf16, #tpu.memory_space<vmem>>, vector<512x256xbf16>
    %cst_9 = arith.constant dense<0.000000e+00> : vector<16x256xf32>
    %11 = tpu.matmul %8, %10, %cst_9 {dimension_numbers = #tpu.dot_dimension_numbers<[1], [0], [0], [1], [0, 0, 1, 1], [], []>} : vector<16x512xbf16>, vector<512x256xbf16>, vector<16x256xf32> -> vector<16x256xf32>
    %12 = vector.broadcast %9 : vector<1x256xf32> to vector<16x256xf32>
    %13 = arith.addf %11, %12 : vector<16x256xf32>
    %cst_10 = arith.constant 0.000000e+00 : f32
    %14 = vector.broadcast %cst_10 : f32 to vector<16x256xf32>
    %15 = arith.maximumf %13, %14 : vector<16x256xf32>
    %16 = arith.truncf %15 : vector<16x256xf32> to vector<16x256xbf16>
    %c0_11 = arith.constant 0 : index
    %c768 = arith.constant 768 : index
    %17 = vector.load %arg7[%c0_11, %c768] : memref<1x1152xf32, #tpu.memory_space<vmem>>, vector<1x128xf32>
    %c0_12 = arith.constant 0 : index
    %c0_13 = arith.constant 0 : index
    %18 = vector.load %arg4[%c0_12, %c0_13] : memref<256x128xbf16, #tpu.memory_space<vmem>>, vector<256x128xbf16>
    %cst_14 = arith.constant dense<0.000000e+00> : vector<16x128xf32>
    %19 = tpu.matmul %16, %18, %cst_14 {dimension_numbers = #tpu.dot_dimension_numbers<[1], [0], [0], [1], [0, 0, 1, 1], [], []>} : vector<16x256xbf16>, vector<256x128xbf16>, vector<16x128xf32> -> vector<16x128xf32>
    %20 = vector.broadcast %17 : vector<1x128xf32> to vector<16x128xf32>
    %21 = arith.addf %19, %20 : vector<16x128xf32>
    %cst_15 = arith.constant 0.000000e+00 : f32
    %22 = vector.broadcast %cst_15 : f32 to vector<16x128xf32>
    %23 = arith.maximumf %21, %22 : vector<16x128xf32>
    %24 = arith.truncf %23 : vector<16x128xf32> to vector<16x128xbf16>
    %c0_16 = arith.constant 0 : index
    %c896 = arith.constant 896 : index
    %25 = vector.load %arg7[%c0_16, %c896] : memref<1x1152xf32, #tpu.memory_space<vmem>>, vector<1x128xf32>
    %c0_17 = arith.constant 0 : index
    %c0_18 = arith.constant 0 : index
    %26 = vector.load %arg5[%c0_17, %c0_18] : memref<128x128xbf16, #tpu.memory_space<vmem>>, vector<128x128xbf16>
    %cst_19 = arith.constant dense<0.000000e+00> : vector<16x128xf32>
    %27 = tpu.matmul %24, %26, %cst_19 {dimension_numbers = #tpu.dot_dimension_numbers<[1], [0], [0], [1], [0, 0, 1, 1], [], []>} : vector<16x128xbf16>, vector<128x128xbf16>, vector<16x128xf32> -> vector<16x128xf32>
    %28 = vector.broadcast %25 : vector<1x128xf32> to vector<16x128xf32>
    %29 = arith.addf %27, %28 : vector<16x128xf32>
    %cst_20 = arith.constant 0.000000e+00 : f32
    %30 = vector.broadcast %cst_20 : f32 to vector<16x128xf32>
    %31 = arith.maximumf %29, %30 : vector<16x128xf32>
    %32 = arith.truncf %31 : vector<16x128xf32> to vector<16x128xbf16>
    %c0_21 = arith.constant 0 : index
    %c1024 = arith.constant 1024 : index
    %33 = vector.load %arg7[%c0_21, %c1024] : memref<1x1152xf32, #tpu.memory_space<vmem>>, vector<1x128xf32>
    %c0_22 = arith.constant 0 : index
    %c0_23 = arith.constant 0 : index
    %34 = vector.load %arg6[%c0_22, %c0_23] : memref<128x128xbf16, #tpu.memory_space<vmem>>, vector<128x128xbf16>
    %cst_24 = arith.constant dense<0.000000e+00> : vector<16x128xf32>
    %35 = tpu.matmul %32, %34, %cst_24 {dimension_numbers = #tpu.dot_dimension_numbers<[1], [0], [0], [1], [0, 0, 1, 1], [], []>} : vector<16x128xbf16>, vector<128x128xbf16>, vector<16x128xf32> -> vector<16x128xf32>
    %36 = vector.broadcast %33 : vector<1x128xf32> to vector<16x128xf32>
    %37 = arith.addf %35, %36 : vector<16x128xf32>
    %c0_25 = arith.constant 0 : index
    %c0_26 = arith.constant 0 : index
    %38 = vector.load %arg8[%c0_25, %c0_26] : memref<16x128xf32, #tpu.memory_space<vmem>>, vector<16x128xf32>
    tpu.vector_store %arg8[%c0_25, %c0_26], %37 {strides = array<i32>} : memref<16x128xf32, #tpu.memory_space<vmem>>, vector<16x128xf32>,
    return
  }
  func.func @transform_0(%arg0: i32) -> (i32, i32) {
    %c0_i32 = arith.constant 0 : i32
    %c0_i32_0 = arith.constant 0 : i32
    return %arg0, %c0_i32 : i32, i32
  }
  func.func @transform_1(%arg0: i32) -> (i32, i32) {
    %c0_i32 = arith.constant 0 : i32
    %c0_i32_0 = arith.constant 0 : i32
    %c0_i32_1 = arith.constant 0 : i32
    return %c0_i32, %c0_i32_0 : i32, i32
  }
  func.func @transform_2(%arg0: i32) -> (i32, i32) {
    %c0_i32 = arith.constant 0 : i32
    %c0_i32_0 = arith.constant 0 : i32
    %c0_i32_1 = arith.constant 0 : i32
    return %c0_i32, %c0_i32_0 : i32, i32
  }
  func.func @transform_3(%arg0: i32) -> (i32, i32) {
    %c0_i32 = arith.constant 0 : i32
    %c0_i32_0 = arith.constant 0 : i32
    %c0_i32_1 = arith.constant 0 : i32
    return %c0_i32, %c0_i32_0 : i32, i32
  }
  func.func @transform_4(%arg0: i32) -> (i32, i32) {
    %c0_i32 = arith.constant 0 : i32
    %c0_i32_0 = arith.constant 0 : i32
    %c0_i32_1 = arith.constant 0 : i32
    return %c0_i32, %c0_i32_0 : i32, i32
  }
  func.func @transform_5(%arg0: i32) -> (i32, i32) {
    %c0_i32 = arith.constant 0 : i32
    %c0_i32_0 = arith.constant 0 : i32
    %c0_i32_1 = arith.constant 0 : i32
    return %c0_i32, %c0_i32_0 : i32, i32
  }
  func.func @transform_6(%arg0: i32) -> (i32, i32) {
    %c0_i32 = arith.constant 0 : i32
    %c0_i32_0 = arith.constant 0 : i32
    %c0_i32_1 = arith.constant 0 : i32
    return %c0_i32, %c0_i32_0 : i32, i32
  }
  func.func @transform_7(%arg0: i32) -> (i32, i32) {
    %c0_i32 = arith.constant 0 : i32
    %c0_i32_0 = arith.constant 0 : i32
    return %arg0, %c0_i32 : i32, i32
  }
}

module attributes {stable_mosaic.version = 11 : i64} {
  func.func @mlp_kernel(%arg0: i32, %arg1: memref<16x128xbf16, #tpu.memory_space<vmem>>, %arg2: memref<128x512xbf16, #tpu.memory_space<vmem>>, %arg3: memref<512x256xbf16, #tpu.memory_space<vmem>>, %arg4: memref<256x128xbf16, #tpu.memory_space<vmem>>, %arg5: memref<128x128xbf16, #tpu.memory_space<vmem>>, %arg6: memref<128x128xbf16, #tpu.memory_space<vmem>>, %arg7: memref<1x1152xf32, #tpu.memory_space<vmem>>, %arg8: memref<16x128xf32, #tpu.memory_space<vmem>>) attributes {dimension_semantics = [#tpu.dimension_semantics<parallel>], iteration_bounds = array<i64: 1>, scalar_prefetch = 0 : i64, scratch_operands = 0 : i64, tpu.core_type = #tpu.core_type<tc>, window_params = [{transform_indices = @transform_0, window_bounds = array<i64: 16, 128>}, {pipeline_mode = #tpu.pipeline_mode<synchronous>, transform_indices = @transform_1, window_bounds = array<i64: 128, 512>}, {pipeline_mode = #tpu.pipeline_mode<synchronous>, transform_indices = @transform_2, window_bounds = array<i64: 512, 256>}, {pipeline_mode = #tpu.pipeline_mode<synchronous>, transform_indices = @transform_3, window_bounds = array<i64: 256, 128>}, {pipeline_mode = #tpu.pipeline_mode<synchronous>, transform_indices = @transform_4, window_bounds = array<i64: 128, 128>}, {pipeline_mode = #tpu.pipeline_mode<synchronous>, transform_indices = @transform_5, window_bounds = array<i64: 128, 128>}, {pipeline_mode = #tpu.pipeline_mode<synchronous>, transform_indices = @transform_6, window_bounds = array<i64: 1, 1152>}, {transform_indices = @transform_7, window_bounds = array<i64: 16, 128>}]} {
    %c0 = arith.constant 0 : index
    %c0_0 = arith.constant 0 : index
    %0 = vector.load %arg1[%c0, %c0_0] : memref<16x128xbf16, #tpu.memory_space<vmem>>, vector<16x128xbf16>
    %c0_1 = arith.constant 0 : index
    %c0_2 = arith.constant 0 : index
    %1 = vector.load %arg7[%c0_1, %c0_2] : memref<1x1152xf32, #tpu.memory_space<vmem>>, vector<1x512xf32>
    %c0_3 = arith.constant 0 : index
    %c0_4 = arith.constant 0 : index
    %2 = vector.load %arg2[%c0_3, %c0_4] : memref<128x512xbf16, #tpu.memory_space<vmem>>, vector<128x512xbf16>
    %cst = arith.constant dense<0.000000e+00> : vector<16x512xf32>
    %3 = tpu.matmul %0, %2, %cst {dimension_numbers = #tpu.dot_dimension_numbers<[1], [0], [0], [1], [0, 0, 1, 1], [], []>} : vector<16x128xbf16>, vector<128x512xbf16>, vector<16x512xf32> -> vector<16x512xf32>
    %4 = vector.broadcast %1 : vector<1x512xf32> to vector<16x512xf32>
    %5 = arith.addf %3, %4 : vector<16x512xf32>
    %cst_5 = arith.constant 0.000000e+00 : f32
    %6 = vector.broadcast %cst_5 : f32 to vector<16x512xf32>
    %7 = arith.maximumf %5, %6 : vector<16x512xf32>
    %8 = arith.truncf %7 : vector<16x512xf32> to vector<16x512xbf16>
    %c0_6 = arith.constant 0 : index
    %c512 = arith.constant 512 : index
    %9 = vector.load %arg7[%c0_6, %c512] : memref<1x1152xf32, #tpu.memory_space<vmem>>, vector<1x256xf32>
    %c0_7 = arith.constant 0 : index
    %c0_8 = arith.constant 0 : index
    %10 = vector.load %arg3[%c0_7, %c0_8] : memref<512x256xbf16, #tpu.memory_space<vmem>>, vector<512x256xbf16>
    %cst_9 = arith.constant dense<0.000000e+00> : vector<16x256xf32>
    %11 = tpu.matmul %8, %10, %cst_9 {dimension_numbers = #tpu.dot_dimension_numbers<[1], [0], [0], [1], [0, 0, 1, 1], [], []>} : vector<16x512xbf16>, vector<512x256xbf16>, vector<16x256xf32> -> vector<16x256xf32>
    %12 = vector.broadcast %9 : vector<1x256xf32> to vector<16x256xf32>
    %13 = arith.addf %11, %12 : vector<16x256xf32>
    %cst_10 = arith.constant 0.000000e+00 : f32
    %14 = vector.broadcast %cst_10 : f32 to vector<16x256xf32>
    %15 = arith.maximumf %13, %14 : vector<16x256xf32>
    %16 = arith.truncf %15 : vector<16x256xf32> to vector<16x256xbf16>
    %c0_11 = arith.constant 0 : index
    %c768 = arith.constant 768 : index
    %17 = vector.load %arg7[%c0_11, %c768] : memref<1x1152xf32, #tpu.memory_space<vmem>>, vector<1x128xf32>
    %c0_12 = arith.constant 0 : index
    %c0_13 = arith.constant 0 : index
    %18 = vector.load %arg4[%c0_12, %c0_13] : memref<256x128xbf16, #tpu.memory_space<vmem>>, vector<256x128xbf16>
    %cst_14 = arith.constant dense<0.000000e+00> : vector<16x128xf32>
    %19 = tpu.matmul %16, %18, %cst_14 {dimension_numbers = #tpu.dot_dimension_numbers<[1], [0], [0], [1], [0, 0, 1, 1], [], []>} : vector<16x256xbf16>, vector<256x128xbf16>, vector<16x128xf32> -> vector<16x128xf32>
    %20 = vector.broadcast %17 : vector<1x128xf32> to vector<16x128xf32>
    %21 = arith.addf %19, %20 : vector<16x128xf32>
    %cst_15 = arith.constant 0.000000e+00 : f32
    %22 = vector.broadcast %cst_15 : f32 to vector<16x128xf32>
    %23 = arith.maximumf %21, %22 : vector<16x128xf32>
    %24 = arith.truncf %23 : vector<16x128xf32> to vector<16x128xbf16>
    %c0_16 = arith.constant 0 : index
    %c896 = arith.constant 896 : index
    %25 = vector.load %arg7[%c0_16, %c896] : memref<1x1152xf32, #tpu.memory_space<vmem>>, vector<1x128xf32>
    %c0_17 = arith.constant 0 : index
    %c0_18 = arith.constant 0 : index
    %26 = vector.load %arg5[%c0_17, %c0_18] : memref<128x128xbf16, #tpu.memory_space<vmem>>, vector<128x128xbf16>
    %cst_19 = arith.constant dense<0.000000e+00> : vector<16x128xf32>
    %27 = tpu.matmul %24, %26, %cst_19 {dimension_numbers = #tpu.dot_dimension_numbers<[1], [0], [0], [1], [0, 0, 1, 1], [], []>} : vector<16x128xbf16>, vector<128x128xbf16>, vector<16x128xf32> -> vector<16x128xf32>
    %28 = vector.broadcast %25 : vector<1x128xf32> to vector<16x128xf32>
    %29 = arith.addf %27, %28 : vector<16x128xf32>
    %cst_20 = arith.constant 0.000000e+00 : f32
    %30 = vector.broadcast %cst_20 : f32 to vector<16x128xf32>
    %31 = arith.maximumf %29, %30 : vector<16x128xf32>
    %32 = arith.truncf %31 : vector<16x128xf32> to vector<16x128xbf16>
    %c0_21 = arith.constant 0 : index
    %c1024 = arith.constant 1024 : index
    %33 = vector.load %arg7[%c0_21, %c1024] : memref<1x1152xf32, #tpu.memory_space<vmem>>, vector<1x128xf32>
    %c0_22 = arith.constant 0 : index
    %c0_23 = arith.constant 0 : index
    %34 = vector.load %arg6[%c0_22, %c0_23] : memref<128x128xbf16, #tpu.memory_space<vmem>>, vector<128x128xbf16>
    %cst_24 = arith.constant dense<0.000000e+00> : vector<16x128xf32>
    %35 = tpu.matmul %32, %34, %cst_24 {dimension_numbers = #tpu.dot_dimension_numbers<[1], [0], [0], [1], [0, 0, 1, 1], [], []>} : vector<16x128xbf16>, vector<128x128xbf16>, vector<16x128xf32> -> vector<16x128xf32>
    %36 = vector.broadcast %33 : vector<1x128xf32> to vector<16x128xf32>
    %37 = arith.addf %35, %36 : vector<16x128xf32>
    %c0_25 = arith.constant 0 : index
    %c0_26 = arith.constant 0 : index
    %38 = vector.load %arg8[%c0_25, %c0_26] : memref<16x128xf32, #tpu.memory_space<vmem>>, vector<16x128xf32>
    tpu.vector_store %arg8[%c0_25, %c0_26], %37 {strides = array<i32>} : memref<16x128xf32, #tpu.memory_space<vmem>>, vector<16x128xf32>,
    return
  }
  func.func @transform_0(%arg0: i32) -> (i32, i32) {
    %c0_i32 = arith.constant 0 : i32
    %c0_i32_0 = arith.constant 0 : i32
    return %arg0, %c0_i32 : i32, i32
  }
  func.func @transform_1(%arg0: i32) -> (i32, i32) {
    %c0_i32 = arith.constant 0 : i32
    %c0_i32_0 = arith.constant 0 : i32
    %c0_i32_1 = arith.constant 0 : i32
    return %c0_i32, %c0_i32_0 : i32, i32
  }
  func.func @transform_2(%arg0: i32) -> (i32, i32) {
    %c0_i32 = arith.constant 0 : i32
    %c0_i32_0 = arith.constant 0 : i32
    %c0_i32_1 = arith.constant 0 : i32
    return %c0_i32, %c0_i32_0 : i32, i32
  }
  func.func @transform_3(%arg0: i32) -> (i32, i32) {
    %c0_i32 = arith.constant 0 : i32
    %c0_i32_0 = arith.constant 0 : i32
    %c0_i32_1 = arith.constant 0 : i32
    return %c0_i32, %c0_i32_0 : i32, i32
  }
  func.func @transform_4(%arg0: i32) -> (i32, i32) {
    %c0_i32 = arith.constant 0 : i32
    %c0_i32_0 = arith.constant 0 : i32
    %c0_i32_1 = arith.constant 0 : i32
    return %c0_i32, %c0_i32_0 : i32, i32
  }
  func.func @transform_5(%arg0: i32) -> (i32, i32) {
    %c0_i32 = arith.constant 0 : i32
    %c0_i32_0 = arith.constant 0 : i32
    %c0_i32_1 = arith.constant 0 : i32
    return %c0_i32, %c0_i32_0 : i32, i32
  }
  func.func @transform_6(%arg0: i32) -> (i32, i32) {
    %c0_i32 = arith.constant 0 : i32
    %c0_i32_0 = arith.constant 0 : i32
    %c0_i32_1 = arith.constant 0 : i32
    return %c0_i32, %c0_i32_0 : i32, i32
  }
  func.func @transform_7(%arg0: i32) -> (i32, i32) {
    %c0_i32 = arith.constant 0 : i32
    %c0_i32_0 = arith.constant 0 : i32
    return %arg0, %c0_i32 : i32, i32
  }
}

</mosaic_0001>

<llo_original>
// kernel: tpu_custom_call.1
$region0: #{tpu_custom_call.1}
  #allocation0 [shape = 'u32[]', space=smem, size = 0x4, offset = 0x4, fixed_abs, tag = 'smem constant byte address 0x4 - core index']
  #allocation1 [shape = 'u32[144,128]{1,0:T(1,128)}', space=vmem, size = 0x12000, scoped, tag = 'internal scratch']
  %s0 = inlined_call_operand.hbm [shape: bf16[16,128], index: 0, kind: input, shape index: {}]
  %s1 = inlined_call_operand.hbm [shape: bf16[128,512], index: 1, kind: input, shape index: {}]
  %s2 = inlined_call_operand.hbm [shape: bf16[512,256], index: 2, kind: input, shape index: {}]
  %s3 = inlined_call_operand.hbm [shape: bf16[256,128], index: 3, kind: input, shape index: {}]
  %s4 = inlined_call_operand.hbm [shape: bf16[128,128], index: 4, kind: input, shape index: {}]
  %s5 = inlined_call_operand.hbm [shape: bf16[128,128], index: 5, kind: input, shape index: {}]
  %s6 = inlined_call_operand.vmem [shape: f32[1,1152], index: 6, kind: input, shape index: {}]
  %s7 = inlined_call_operand.hbm [shape: f32[16,128], index: 7, kind: output, shape index: {}]
  %s8 = sld [smem:[#allocation0]]
  $region62: #{tpu_custom_call.1} parent=0
    _
  %s10 = ssub.s32 1, %s8
  %s11 = scalar_select 0, %s10, %s8
  $region1: #{tpu_custom_call.1} parent=0
    #allocation2 [shape = 'u8[4096]{0}', space=vmem, size = 0x1000, scoped, tag = 'input window, operand 0, single buffered']
    #allocation3 [shape = 's32[1]{0}', space=sflag, size = 0x4, scoped, tag = 'scoped memory for tpu_custom_call.1']
    #allocation4 [shape = 's32[1]{0}', space=sflag, size = 0x4, scoped, tag = 'scoped memory for tpu_custom_call.1']
    #allocation5 [shape = 'u8[131072]{0}', space=vmem, size = 0x20000, scoped, tag = 'input window, operand 1, single buffered']
    #allocation6 [shape = 's32[1]{0}', space=sflag, size = 0x4, scoped, tag = 'scoped memory for tpu_custom_call.1']
    #allocation7 [shape = 'u8[262144]{0}', space=vmem, size = 0x40000, scoped, tag = 'input window, operand 2, single buffered']
    #allocation8 [shape = 'u8[65536]{0}', space=vmem, size = 0x10000, scoped, tag = 'input window, operand 3, single buffered']
    #allocation9 [shape = 's32[1]{0}', space=sflag, size = 0x4, scoped, tag = 'scoped memory for tpu_custom_call.1']
    #allocation10 [shape = 'u8[32768]{0}', space=vmem, size = 0x8000, scoped, tag = 'input window, operand 4, single buffered']
    #allocation11 [shape = 'u8[32768]{0}', space=vmem, size = 0x8000, scoped, tag = 'input window, operand 5, single buffered']
    #allocation12 [shape = 's32[1]{0}', space=sflag, size = 0x4, scoped, tag = 'scoped memory for tpu_custom_call.1']
    #allocation13 [shape = 'u8[8192]{0}', space=vmem, size = 0x2000, scoped, tag = 'output window, operand 0, single buffered']
    %12 = vsyncpa [#allocation3], 0
    %13 = vsyncpa [#allocation6], 0
    %14 = vsyncpa [#allocation9], 0
    %15 = vsyncpa [#allocation12], 0
    %16 = vsyncpa [#allocation4], 0
    // Predicated region
    $region2: #{tpu_custom_call.1} parent=1 // pred_check
      _
    $region3: #{tpu_custom_call.1} parent=1 // pred_check_branch
      %18 = sbr.rel (0) target = $region5
    $region4: #{tpu_custom_call.1} parent=1 // pred_region
      %s20 = ssub.s32 128, 128
      %21 = vsyncadd [#allocation3], %s20
      %s22 = sshll.u32 [#allocation2], 4
      %s23 = int_to_ptr.vmem [resolvable:$true] %s22
      %28 = dma.hbm_to_vmem [thread:$0]  %s0, 128, %s23, [#allocation3], 64, 64, 4
    $region5: #{tpu_custom_call.1} parent=1 // pred_fallthru
      _
    // Predicated region
    $region6: #{tpu_custom_call.1} parent=1 // pred_check
      _
    $region7: #{tpu_custom_call.1} parent=1 // pred_check_branch
      %30 = sbr.rel (0) target = $region9
    $region8: #{tpu_custom_call.1} parent=1 // pred_region
      %s32 = ssub.s32 4096, 4096
      %33 = vsyncadd [#allocation6], %s32
      %s34 = sshll.u32 [#allocation5], 4
      %s35 = int_to_ptr.vmem [resolvable:$true] %s34
      %40 = dma.hbm_to_vmem [thread:$0]  %s1, 4096, %s35, [#allocation6], 256, 256, 16
    $region9: #{tpu_custom_call.1} parent=1 // pred_fallthru
      _
    // Predicated region
    $region10: #{tpu_custom_call.1} parent=1 // pred_check
      _
    $region11: #{tpu_custom_call.1} parent=1 // pred_check_branch
      %42 = sbr.rel (0) target = $region13
    $region12: #{tpu_custom_call.1} parent=1 // pred_region
      %s44 = ssub.s32 8192, 8192
      %45 = vsyncadd [#allocation6], %s44
      %s46 = sshll.u32 [#allocation7], 4
      %s47 = int_to_ptr.vmem [resolvable:$true] %s46
      %52 = dma.hbm_to_vmem [thread:$0]  %s2, 8192, %s47, [#allocation6], 128, 128, 8
    $region13: #{tpu_custom_call.1} parent=1 // pred_fallthru
      _
    // Predicated region
    $region14: #{tpu_custom_call.1} parent=1 // pred_check
      _
    $region15: #{tpu_custom_call.1} parent=1 // pred_check_branch
      %54 = sbr.rel (0) target = $region17
    $region16: #{tpu_custom_call.1} parent=1 // pred_region
      %s56 = ssub.s32 2048, 2048
      %57 = vsyncadd [#allocation9], %s56
      %s58 = sshll.u32 [#allocation8], 4
      %s59 = int_to_ptr.vmem [resolvable:$true] %s58
      %64 = dma.hbm_to_vmem [thread:$0]  %s3, 2048, %s59, [#allocation9], 64, 64, 4
    $region17: #{tpu_custom_call.1} parent=1 // pred_fallthru
      _
    // Predicated region
    $region18: #{tpu_custom_call.1} parent=1 // pred_check
      _
    $region19: #{tpu_custom_call.1} parent=1 // pred_check_branch
      %66 = sbr.rel (0) target = $region21
    $region20: #{tpu_custom_call.1} parent=1 // pred_region
      %s68 = ssub.s32 1024, 1024
      %69 = vsyncadd [#allocation9], %s68
      %s70 = sshll.u32 [#allocation10], 4
      %s71 = int_to_ptr.vmem [resolvable:$true] %s70
      %76 = dma.hbm_to_vmem [thread:$0]  %s4, 1024, %s71, [#allocation9], 64, 64, 4
    $region21: #{tpu_custom_call.1} parent=1 // pred_fallthru
      _
    // Predicated region
    $region22: #{tpu_custom_call.1} parent=1 // pred_check
      _
    $region23: #{tpu_custom_call.1} parent=1 // pred_check_branch
      %78 = sbr.rel (0) target = $region25
    $region24: #{tpu_custom_call.1} parent=1 // pred_region
      %s80 = ssub.s32 1024, 1024
      %81 = vsyncadd [#allocation12], %s80
      %s82 = sshll.u32 [#allocation11], 4
      %s83 = int_to_ptr.vmem [resolvable:$true] %s82
      %88 = dma.hbm_to_vmem [thread:$0]  %s5, 1024, %s83, [#allocation12], 64, 64, 4
    $region25: #{tpu_custom_call.1} parent=1 // pred_fallthru
      _
    // Predicated region
    $region26: #{tpu_custom_call.1} parent=1 // pred_check
      _
    $region27: #{tpu_custom_call.1} parent=1 // pred_check_branch
      %90 = sbr.rel (0) target = $region29
    $region28: #{tpu_custom_call.1} parent=1 // pred_region
      _
    $region29: #{tpu_custom_call.1} parent=1 // pred_fallthru
      _
    // Predicated region
    $region30: #{tpu_custom_call.1} parent=1 // pred_check
      _
    $region31: #{tpu_custom_call.1} parent=1 // pred_check_branch
      %92 = sbr.rel (0) target = $region33
    $region32: #{tpu_custom_call.1} parent=1 // pred_region
      %93 = dma.done [#allocation3], 128
    $region33: #{tpu_custom_call.1} parent=1 // pred_fallthru
      _
    // Predicated region
    $region34: #{tpu_custom_call.1} parent=1 // pred_check
      _
    $region35: #{tpu_custom_call.1} parent=1 // pred_check_branch
      %95 = sbr.rel (0) target = $region37
    $region36: #{tpu_custom_call.1} parent=1 // pred_region
      %96 = dma.done [#allocation6], 4096
    $region37: #{tpu_custom_call.1} parent=1 // pred_fallthru
      _
    // Predicated region
    $region38: #{tpu_custom_call.1} parent=1 // pred_check
      _
    $region39: #{tpu_custom_call.1} parent=1 // pred_check_branch
      %98 = sbr.rel (0) target = $region41
    $region40: #{tpu_custom_call.1} parent=1 // pred_region
      %99 = dma.done [#allocation6], 8192
    $region41: #{tpu_custom_call.1} parent=1 // pred_fallthru
      _
    // Predicated region
    $region42: #{tpu_custom_call.1} parent=1 // pred_check
      _
    $region43: #{tpu_custom_call.1} parent=1 // pred_check_branch
      %101 = sbr.rel (0) target = $region45
    $region44: #{tpu_custom_call.1} parent=1 // pred_region
      %102 = dma.done [#allocation9], 2048
    $region45: #{tpu_custom_call.1} parent=1 // pred_fallthru
      _
    // Predicated region
    $region46: #{tpu_custom_call.1} parent=1 // pred_check
      _
    $region47: #{tpu_custom_call.1} parent=1 // pred_check_branch
      %104 = sbr.rel (0) target = $region49
    $region48: #{tpu_custom_call.1} parent=1 // pred_region
      %105 = dma.done [#allocation9], 1024
    $region49: #{tpu_custom_call.1} parent=1 // pred_fallthru
      _
    // Predicated region
    $region50: #{tpu_custom_call.1} parent=1 // pred_check
      _
    $region51: #{tpu_custom_call.1} parent=1 // pred_check_branch
      %107 = sbr.rel (0) target = $region53
    $region52: #{tpu_custom_call.1} parent=1 // pred_region
      %108 = dma.done [#allocation12], 1024
    $region53: #{tpu_custom_call.1} parent=1 // pred_fallthru
      _
    %v110 = vld [vmem:[#allocation2] sm:$0xf]
    %v111 = vld [vmem:[#allocation2 + $0x4] sm:$0xf]
    %v112 = vld [vmem:[%s6] sm:$0xf]
    %v113 = vld [vmem:[#allocation5] sm:$0xff]
    %v114 = vld [vmem:[#allocation5 + $0x8] sm:$0xff]
    %v115 = vld [vmem:[#allocation5 + $0x10] sm:$0xff]
    %v116 = vld [vmem:[#allocation5 + $0x18] sm:$0xff]
    %v117 = vld [vmem:[#allocation5 + $0x20] sm:$0xff]
    %v118 = vld [vmem:[#allocation5 + $0x28] sm:$0xff]
    %v119 = vld [vmem:[#allocation5 + $0x30] sm:$0xff]
    %v120 = vld [vmem:[#allocation5 + $0x38] sm:$0xff]
    %v121 = vld [vmem:[#allocation5 + $0x40] sm:$0xff]
    %v122 = vld [vmem:[#allocation5 + $0x48] sm:$0xff]
    %v123 = vld [vmem:[#allocation5 + $0x50] sm:$0xff]
    %v124 = vld [vmem:[#allocation5 + $0x58] sm:$0xff]
    %v125 = vld [vmem:[#allocation5 + $0x60] sm:$0xff]
    %v126 = vld [vmem:[#allocation5 + $0x68] sm:$0xff]
    %v127 = vld [vmem:[#allocation5 + $0x70] sm:$0xff]
    %v128 = vld [vmem:[#allocation5 + $0x78] sm:$0xff]
    %v129 = vld [vmem:[#allocation5 + $0x80] sm:$0xff]
    %v130 = vld [vmem:[#allocation5 + $0x88] sm:$0xff]
    %v131 = vld [vmem:[#allocation5 + $0x90] sm:$0xff]
    %v132 = vld [vmem:[#allocation5 + $0x98] sm:$0xff]
    %v133 = vld [vmem:[#allocation5 + $0xa0] sm:$0xff]
    %v134 = vld [vmem:[#allocation5 + $0xa8] sm:$0xff]
    %v135 = vld [vmem:[#allocation5 + $0xb0] sm:$0xff]
    %v136 = vld [vmem:[#allocation5 + $0xb8] sm:$0xff]
    %v137 = vld [vmem:[#allocation5 + $0xc0] sm:$0xff]
    %v138 = vld [vmem:[#allocation5 + $0xc8] sm:$0xff]
    %v139 = vld [vmem:[#allocation5 + $0xd0] sm:$0xff]
    %v140 = vld [vmem:[#allocation5 + $0xd8] sm:$0xff]
    %v141 = vld [vmem:[#allocation5 + $0xe0] sm:$0xff]
    %v142 = vld [vmem:[#allocation5 + $0xe8] sm:$0xff]
    %v143 = vld [vmem:[#allocation5 + $0xf0] sm:$0xff]
    %v144 = vld [vmem:[#allocation5 + $0xf8] sm:$0xff]
    %v146 = vlaneseq
    %v147 = vshrl.u32 %v146, 7
    %v148 = vsub.s32 0, %v147
    %v149 = vrot.slane %v112, %v148
    %v150 = vlaneseq
    %v151 = vshrl.u32 %v150, 7
    %v152 = vsub.s32 1, %v151
    %v153 = vrot.slane %v112, %v152
    %v154 = vlaneseq
    %v155 = vshrl.u32 %v154, 7
    %v156 = vsub.s32 2, %v155
    %v157 = vrot.slane %v112, %v156
    %v158 = vlaneseq
    %v159 = vshrl.u32 %v158, 7
    %v160 = vsub.s32 3, %v159
    %v161 = vrot.slane %v112, %v160
    %v168 = vunpack.c.l.b16 %v110
    %v169 = vunpack.c.l.b16 %v111
    %v170 = vpack.c.b16 %v169, %v168
    %v204 = vunpack.c.l.b16 %v113
    %v205 = vunpack.c.h.b16 %v113
    %v206 = vunpack.c.l.b16 %v114
    %v207 = vunpack.c.h.b16 %v114
    %v208 = vunpack.c.l.b16 %v115
    %v209 = vunpack.c.h.b16 %v115
    %v210 = vunpack.c.l.b16 %v116
    %v211 = vunpack.c.h.b16 %v116
    %v212 = vunpack.c.l.b16 %v117
    %v213 = vunpack.c.h.b16 %v117
    %v214 = vunpack.c.l.b16 %v118
    %v215 = vunpack.c.h.b16 %v118
    %v216 = vunpack.c.l.b16 %v119
    %v217 = vunpack.c.h.b16 %v119
    %v218 = vunpack.c.l.b16 %v120
    %v219 = vunpack.c.h.b16 %v120
    %v220 = vunpack.c.l.b16 %v121
    %v221 = vunpack.c.h.b16 %v121
    %v222 = vunpack.c.l.b16 %v122
    %v223 = vunpack.c.h.b16 %v122
    %v224 = vunpack.c.l.b16 %v123
    %v225 = vunpack.c.h.b16 %v123
    %v226 = vunpack.c.l.b16 %v124
    %v227 = vunpack.c.h.b16 %v124
    %v228 = vunpack.c.l.b16 %v125
    %v229 = vunpack.c.h.b16 %v125
    %v230 = vunpack.c.l.b16 %v126
    %v231 = vunpack.c.h.b16 %v126
    %v232 = vunpack.c.l.b16 %v127
    %v233 = vunpack.c.h.b16 %v127
    %v234 = vunpack.c.l.b16 %v128
    %v235 = vunpack.c.h.b16 %v128
    %v236 = vunpack.c.l.b16 %v129
    %v237 = vunpack.c.h.b16 %v129
    %v238 = vunpack.c.l.b16 %v130
    %v239 = vunpack.c.h.b16 %v130
    %v240 = vunpack.c.l.b16 %v131
    %v241 = vunpack.c.h.b16 %v131
    %v242 = vunpack.c.l.b16 %v132
    %v243 = vunpack.c.h.b16 %v132
    %v244 = vunpack.c.l.b16 %v133
    %v245 = vunpack.c.h.b16 %v133
    %v246 = vunpack.c.l.b16 %v134
    %v247 = vunpack.c.h.b16 %v134
    %v248 = vunpack.c.l.b16 %v135
    %v249 = vunpack.c.h.b16 %v135
    %v250 = vunpack.c.l.b16 %v136
    %v251 = vunpack.c.h.b16 %v136
    %v252 = vunpack.c.l.b16 %v137
    %v253 = vunpack.c.h.b16 %v137
    %v254 = vunpack.c.l.b16 %v138
    %v255 = vunpack.c.h.b16 %v138
    %v256 = vunpack.c.l.b16 %v139
    %v257 = vunpack.c.h.b16 %v139
    %v258 = vunpack.c.l.b16 %v140
    %v259 = vunpack.c.h.b16 %v140
    %v260 = vunpack.c.l.b16 %v141
    %v261 = vunpack.c.h.b16 %v141
    %v262 = vunpack.c.l.b16 %v142
    %v263 = vunpack.c.h.b16 %v142
    %v264 = vunpack.c.l.b16 %v143
    %v265 = vunpack.c.h.b16 %v143
    %v266 = vunpack.c.l.b16 %v144
    %v267 = vunpack.c.h.b16 %v144
    %v268 = vpack.c.b16 %v208, %v204
    %v269 = vpack.c.b16 %v209, %v205
    %v270 = vpack.c.b16 %v210, %v206
    %v271 = vpack.c.b16 %v211, %v207
    %v272 = vpack.c.b16 %v216, %v212
    %v273 = vpack.c.b16 %v217, %v213
    %v274 = vpack.c.b16 %v218, %v214
    %v275 = vpack.c.b16 %v219, %v215
    %v276 = vpack.c.b16 %v224, %v220
    %v277 = vpack.c.b16 %v225, %v221
    %v278 = vpack.c.b16 %v226, %v222
    %v279 = vpack.c.b16 %v227, %v223
    %v280 = vpack.c.b16 %v232, %v228
    %v281 = vpack.c.b16 %v233, %v229
    %v282 = vpack.c.b16 %v234, %v230
    %v283 = vpack.c.b16 %v235, %v231
    %v284 = vpack.c.b16 %v240, %v236
    %v285 = vpack.c.b16 %v241, %v237
    %v286 = vpack.c.b16 %v242, %v238
    %v287 = vpack.c.b16 %v243, %v239
    %v288 = vpack.c.b16 %v248, %v244
    %v289 = vpack.c.b16 %v249, %v245
    %v290 = vpack.c.b16 %v250, %v246
    %v291 = vpack.c.b16 %v251, %v247
    %v292 = vpack.c.b16 %v256, %v252
    %v293 = vpack.c.b16 %v257, %v253
    %v294 = vpack.c.b16 %v258, %v254
    %v295 = vpack.c.b16 %v259, %v255
    %v296 = vpack.c.b16 %v264, %v260
    %v297 = vpack.c.b16 %v265, %v261
    %v298 = vpack.c.b16 %v266, %v262
    %v299 = vpack.c.b16 %v267, %v263
    %332 = vmatprep.subr.bf16.mxu0 %v297
    %333 = vmatpush1.bf16.msra.mxu0 %v296
    %334 = vmatprep.subr.bf16.mxu0 %v293
    %335 = vmatpush1.bf16.msra.mxu0 %v292
    %336 = vmatprep.subr.bf16.mxu0 %v289
    %337 = vmatpush1.bf16.msra.mxu0 %v288
    %338 = vmatprep.subr.bf16.mxu0 %v285
    %339 = vmatpush1.bf16.msra.mxu0 %v284
    %340 = vmatprep.subr.bf16.mxu0 %v281
    %341 = vmatpush1.bf16.msra.mxu0 %v280
    %342 = vmatprep.subr.bf16.mxu0 %v277
    %343 = vmatpush1.bf16.msra.mxu0 %v276
    %344 = vmatprep.subr.bf16.mxu0 %v273
    %345 = vmatpush1.bf16.msra.mxu0 %v272
    %346 = vmatprep.subr.bf16.mxu0 %v269
    %347 = vmatpush1.bf16.msra.mxu0 %v268
    %348 = vmatprep.subr.bf16.mxu0 0
    %349 = vmatpush2.bf16.msra.mxu0 0
    %350 = vmatprep.subr.bf16.mxu0 0
    %351 = vmatpush2.bf16.msra.mxu0 0
    %352 = vmatprep.subr.bf16.mxu0 0
    %353 = vmatpush2.bf16.msra.mxu0 0
    %354 = vmatprep.subr.bf16.mxu0 0
    %355 = vmatpush2.bf16.msra.mxu0 0
    %356 = vmatprep.subr.bf16.mxu0 0
    %357 = vmatpush2.bf16.msra.mxu0 0
    %358 = vmatprep.subr.bf16.mxu0 0
    %359 = vmatpush2.bf16.msra.mxu0 0
    %360 = vmatprep.subr.bf16.mxu0 0
    %361 = vmatpush2.bf16.msra.mxu0 0
    %362 = vmatprep.subr.bf16.mxu0 0
    %363 = vmatpush2.bf16.msra.mxu0 0
    %364 = vmatprep.mubr.bf16.mxu0 0
    %365 = vmatmul.mubr.bf16.gmra.mxu0 %v170
    %v366 = vpop.f32.mrf.mxu0
    %v367 = vadd.f32 %v149, %v366
    %v368 = vpop.f32.mrf.mxu0
    %v369 = vadd.f32 %v153, %v368
    %v370 = vpop.f32.mrf.mxu0
    %v371 = vadd.f32 %v149, %v370
    %v372 = vpop.f32.mrf.mxu0
    %v373 = vadd.f32 %v153, %v372
    %374 = vdwg.mxu0
    %375 = vmatprep.subr.bf16.mxu0 %v299
    %376 = vmatpush1.bf16.msra.mxu0 %v298
    %377 = vmatprep.subr.bf16.mxu0 %v295
    %378 = vmatpush1.bf16.msra.mxu0 %v294
    %379 = vmatprep.subr.bf16.mxu0 %v291
    %380 = vmatpush1.bf16.msra.mxu0 %v290
    %381 = vmatprep.subr.bf16.mxu0 %v287
    %382 = vmatpush1.bf16.msra.mxu0 %v286
    %383 = vmatprep.subr.bf16.mxu0 %v283
    %384 = vmatpush1.bf16.msra.mxu0 %v282
    %385 = vmatprep.subr.bf16.mxu0 %v279
    %386 = vmatpush1.bf16.msra.mxu0 %v278
    %387 = vmatprep.subr.bf16.mxu0 %v275
    %388 = vmatpush1.bf16.msra.mxu0 %v274
    %389 = vmatprep.subr.bf16.mxu0 %v271
    %390 = vmatpush1.bf16.msra.mxu0 %v270
    %391 = vmatprep.subr.bf16.mxu0 0
    %392 = vmatpush2.bf16.msra.mxu0 0
    %393 = vmatprep.subr.bf16.mxu0 0
    %394 = vmatpush2.bf16.msra.mxu0 0
    %395 = vmatprep.subr.bf16.mxu0 0
    %396 = vmatpush2.bf16.msra.mxu0 0
    %397 = vmatprep.subr.bf16.mxu0 0
    %398 = vmatpush2.bf16.msra.mxu0 0
    %399 = vmatprep.subr.bf16.mxu0 0
    %400 = vmatpush2.bf16.msra.mxu0 0
    %401 = vmatprep.subr.bf16.mxu0 0
    %402 = vmatpush2.bf16.msra.mxu0 0
    %403 = vmatprep.subr.bf16.mxu0 0
    %404 = vmatpush2.bf16.msra.mxu0 0
    %405 = vmatprep.subr.bf16.mxu0 0
    %406 = vmatpush2.bf16.msra.mxu0 0
    %407 = vmatprep.mubr.bf16.mxu0 0
    %408 = vmatmul.mubr.bf16.gmra.mxu0 %v170
    %v409 = vpop.f32.mrf.mxu0
    %v410 = vadd.f32 %v157, %v409
    %v411 = vpop.f32.mrf.mxu0
    %v412 = vadd.f32 %v161, %v411
    %v413 = vpop.f32.mrf.mxu0
    %v414 = vadd.f32 %v157, %v413
    %v415 = vpop.f32.mrf.mxu0
    %v416 = vadd.f32 %v161, %v415
    %417 = vdwg.mxu0
    %v418 = vmax.f32 %v367, 0.0
    %v419 = vmax.f32 %v369, 0.0
    %v420 = vmax.f32 %v410, 0.0
    %v421 = vmax.f32 %v412, 0.0
    %v422 = vmax.f32 %v371, 0.0
    %v423 = vmax.f32 %v373, 0.0
    %v424 = vmax.f32 %v414, 0.0
    %v425 = vmax.f32 %v416, 0.0
    %v426 = vpack.c.bf16 %v422, %v418
    %v427 = vpack.c.bf16 %v423, %v419
    %v428 = vpack.c.bf16 %v424, %v420
    %v429 = vpack.c.bf16 %v425, %v421
    %v430 = vld [vmem:[%s6 + $0x4] sm:$0x3]
    %v431 = vld [vmem:[#allocation7] sm:$0xff]
    %v432 = vld [vmem:[#allocation7 + $0x8] sm:$0xff]
    %v433 = vld [vmem:[#allocation7 + $0x10] sm:$0xff]
    %v434 = vld [vmem:[#allocation7 + $0x18] sm:$0xff]
    %v435 = vld [vmem:[#allocation7 + $0x20] sm:$0xff]
    %v436 = vld [vmem:[#allocation7 + $0x28] sm:$0xff]
    %v437 = vld [vmem:[#allocation7 + $0x30] sm:$0xff]
    %v438 = vld [vmem:[#allocation7 + $0x38] sm:$0xff]
    %v439 = vld [vmem:[#allocation7 + $0x40] sm:$0xff]
    %v440 = vld [vmem:[#allocation7 + $0x48] sm:$0xff]
    %v441 = vld [vmem:[#allocation7 + $0x50] sm:$0xff]
    %v442 = vld [vmem:[#allocation7 + $0x58] sm:$0xff]
    %v443 = vld [vmem:[#allocation7 + $0x60] sm:$0xff]
    %v444 = vld [vmem:[#allocation7 + $0x68] sm:$0xff]
    %v445 = vld [vmem:[#allocation7 + $0x70] sm:$0xff]
    %v446 = vld [vmem:[#allocation7 + $0x78] sm:$0xff]
    %v447 = vld [vmem:[#allocation7 + $0x80] sm:$0xff]
    %v448 = vld [vmem:[#allocation7 + $0x88] sm:$0xff]
    %v449 = vld [vmem:[#allocation7 + $0x90] sm:$0xff]
    %v450 = vld [vmem:[#allocation7 + $0x98] sm:$0xff]
    %v451 = vld [vmem:[#allocation7 + $0xa0] sm:$0xff]
    %v452 = vld [vmem:[#allocation7 + $0xa8] sm:$0xff]
    %v453 = vld [vmem:[#allocation7 + $0xb0] sm:$0xff]
    %v454 = vld [vmem:[#allocation7 + $0xb8] sm:$0xff]
    %v455 = vld [vmem:[#allocation7 + $0xc0] sm:$0xff]
    %v456 = vld [vmem:[#allocation7 + $0xc8] sm:$0xff]
    %v457 = vld [vmem:[#allocation7 + $0xd0] sm:$0xff]
    %v458 = vld [vmem:[#allocation7 + $0xd8] sm:$0xff]
    %v459 = vld [vmem:[#allocation7 + $0xe0] sm:$0xff]
    %v460 = vld [vmem:[#allocation7 + $0xe8] sm:$0xff]
    %v461 = vld [vmem:[#allocation7 + $0xf0] sm:$0xff]
    %v462 = vld [vmem:[#allocation7 + $0xf8] sm:$0xff]
    %v463 = vld [vmem:[#allocation7 + $0x100] sm:$0xff]
    %v464 = vld [vmem:[#allocation7 + $0x108] sm:$0xff]
    %v465 = vld [vmem:[#allocation7 + $0x110] sm:$0xff]
    %v466 = vld [vmem:[#allocation7 + $0x118] sm:$0xff]
    %v467 = vld [vmem:[#allocation7 + $0x120] sm:$0xff]
    %v468 = vld [vmem:[#allocation7 + $0x128] sm:$0xff]
    %v469 = vld [vmem:[#allocation7 + $0x130] sm:$0xff]
    %v470 = vld [vmem:[#allocation7 + $0x138] sm:$0xff]
    %v471 = vld [vmem:[#allocation7 + $0x140] sm:$0xff]
    %v472 = vld [vmem:[#allocation7 + $0x148] sm:$0xff]
    %v473 = vld [vmem:[#allocation7 + $0x150] sm:$0xff]
    %v474 = vld [vmem:[#allocation7 + $0x158] sm:$0xff]
    %v475 = vld [vmem:[#allocation7 + $0x160] sm:$0xff]
    %v476 = vld [vmem:[#allocation7 + $0x168] sm:$0xff]
    %v477 = vld [vmem:[#allocation7 + $0x170] sm:$0xff]
    %v478 = vld [vmem:[#allocation7 + $0x178] sm:$0xff]
    %v479 = vld [vmem:[#allocation7 + $0x180] sm:$0xff]
    %v480 = vld [vmem:[#allocation7 + $0x188] sm:$0xff]
    %v481 = vld [vmem:[#allocation7 + $0x190] sm:$0xff]
    %v482 = vld [vmem:[#allocation7 + $0x198] sm:$0xff]
    %v483 = vld [vmem:[#allocation7 + $0x1a0] sm:$0xff]
    %v484 = vld [vmem:[#allocation7 + $0x1a8] sm:$0xff]
    %v485 = vld [vmem:[#allocation7 + $0x1b0] sm:$0xff]
    %v486 = vld [vmem:[#allocation7 + $0x1b8] sm:$0xff]
    %v487 = vld [vmem:[#allocation7 + $0x1c0] sm:$0xff]
    %v488 = vld [vmem:[#allocation7 + $0x1c8] sm:$0xff]
    %v489 = vld [vmem:[#allocation7 + $0x1d0] sm:$0xff]
    %v490 = vld [vmem:[#allocation7 + $0x1d8] sm:$0xff]
    %v491 = vld [vmem:[#allocation7 + $0x1e0] sm:$0xff]
    %v492 = vld [vmem:[#allocation7 + $0x1e8] sm:$0xff]
    %v493 = vld [vmem:[#allocation7 + $0x1f0] sm:$0xff]
    %v494 = vld [vmem:[#allocation7 + $0x1f8] sm:$0xff]
    %v496 = vlaneseq
    %v497 = vshrl.u32 %v496, 7
    %v498 = vsub.s32 0, %v497
    %v499 = vrot.slane %v430, %v498
    %v500 = vlaneseq
    %v501 = vshrl.u32 %v500, 7
    %v502 = vsub.s32 1, %v501
    %v503 = vrot.slane %v430, %v502
    %v570 = vunpack.c.l.b16 %v431
    %v571 = vunpack.c.h.b16 %v431
    %v572 = vunpack.c.l.b16 %v432
    %v573 = vunpack.c.h.b16 %v432
    %v574 = vunpack.c.l.b16 %v433
    %v575 = vunpack.c.h.b16 %v433
    %v576 = vunpack.c.l.b16 %v434
    %v577 = vunpack.c.h.b16 %v434
    %v578 = vunpack.c.l.b16 %v435
    %v579 = vunpack.c.h.b16 %v435
    %v580 = vunpack.c.l.b16 %v436
    %v581 = vunpack.c.h.b16 %v436
    %v582 = vunpack.c.l.b16 %v437
    %v583 = vunpack.c.h.b16 %v437
    %v584 = vunpack.c.l.b16 %v438
    %v585 = vunpack.c.h.b16 %v438
    %v586 = vunpack.c.l.b16 %v439
    %v587 = vunpack.c.h.b16 %v439
    %v588 = vunpack.c.l.b16 %v440
    %v589 = vunpack.c.h.b16 %v440
    %v590 = vunpack.c.l.b16 %v441
    %v591 = vunpack.c.h.b16 %v441
    %v592 = vunpack.c.l.b16 %v442
    %v593 = vunpack.c.h.b16 %v442
    %v594 = vunpack.c.l.b16 %v443
    %v595 = vunpack.c.h.b16 %v443
    %v596 = vunpack.c.l.b16 %v444
    %v597 = vunpack.c.h.b16 %v444
    %v598 = vunpack.c.l.b16 %v445
    %v599 = vunpack.c.h.b16 %v445
    %v600 = vunpack.c.l.b16 %v446
    %v601 = vunpack.c.h.b16 %v446
    %v602 = vunpack.c.l.b16 %v447
    %v603 = vunpack.c.h.b16 %v447
    %v604 = vunpack.c.l.b16 %v448
    %v605 = vunpack.c.h.b16 %v448
    %v606 = vunpack.c.l.b16 %v449
    %v607 = vunpack.c.h.b16 %v449
    %v608 = vunpack.c.l.b16 %v450
    %v609 = vunpack.c.h.b16 %v450
    %v610 = vunpack.c.l.b16 %v451
    %v611 = vunpack.c.h.b16 %v451
    %v612 = vunpack.c.l.b16 %v452
    %v613 = vunpack.c.h.b16 %v452
    %v614 = vunpack.c.l.b16 %v453
    %v615 = vunpack.c.h.b16 %v453
    %v616 = vunpack.c.l.b16 %v454
    %v617 = vunpack.c.h.b16 %v454
    %v618 = vunpack.c.l.b16 %v455
    %v619 = vunpack.c.h.b16 %v455
    %v620 = vunpack.c.l.b16 %v456
    %v621 = vunpack.c.h.b16 %v456
    %v622 = vunpack.c.l.b16 %v457
    %v623 = vunpack.c.h.b16 %v457
    %v624 = vunpack.c.l.b16 %v458
    %v625 = vunpack.c.h.b16 %v458
    %v626 = vunpack.c.l.b16 %v459
    %v627 = vunpack.c.h.b16 %v459
    %v628 = vunpack.c.l.b16 %v460
    %v629 = vunpack.c.h.b16 %v460
    %v630 = vunpack.c.l.b16 %v461
    %v631 = vunpack.c.h.b16 %v461
    %v632 = vunpack.c.l.b16 %v462
    %v633 = vunpack.c.h.b16 %v462
    %v634 = vunpack.c.l.b16 %v463
    %v635 = vunpack.c.h.b16 %v463
    %v636 = vunpack.c.l.b16 %v464
    %v637 = vunpack.c.h.b16 %v464
    %v638 = vunpack.c.l.b16 %v465
    %v639 = vunpack.c.h.b16 %v465
    %v640 = vunpack.c.l.b16 %v466
    %v641 = vunpack.c.h.b16 %v466
    %v642 = vunpack.c.l.b16 %v467
    %v643 = vunpack.c.h.b16 %v467
    %v644 = vunpack.c.l.b16 %v468
    %v645 = vunpack.c.h.b16 %v468
    %v646 = vunpack.c.l.b16 %v469
    %v647 = vunpack.c.h.b16 %v469
    %v648 = vunpack.c.l.b16 %v470
    %v649 = vunpack.c.h.b16 %v470
    %v650 = vunpack.c.l.b16 %v471
    %v651 = vunpack.c.h.b16 %v471
    %v652 = vunpack.c.l.b16 %v472
    %v653 = vunpack.c.h.b16 %v472
    %v654 = vunpack.c.l.b16 %v473
    %v655 = vunpack.c.h.b16 %v473
    %v656 = vunpack.c.l.b16 %v474
    %v657 = vunpack.c.h.b16 %v474
    %v658 = vunpack.c.l.b16 %v475
    %v659 = vunpack.c.h.b16 %v475
    %v660 = vunpack.c.l.b16 %v476
    %v661 = vunpack.c.h.b16 %v476
    %v662 = vunpack.c.l.b16 %v477
    %v663 = vunpack.c.h.b16 %v477
    %v664 = vunpack.c.l.b16 %v478
    %v665 = vunpack.c.h.b16 %v478
    %v666 = vunpack.c.l.b16 %v479
    %v667 = vunpack.c.h.b16 %v479
    %v668 = vunpack.c.l.b16 %v480
    %v669 = vunpack.c.h.b16 %v480
    %v670 = vunpack.c.l.b16 %v481
    %v671 = vunpack.c.h.b16 %v481
    %v672 = vunpack.c.l.b16 %v482
    %v673 = vunpack.c.h.b16 %v482
    %v674 = vunpack.c.l.b16 %v483
    %v675 = vunpack.c.h.b16 %v483
    %v676 = vunpack.c.l.b16 %v484
    %v677 = vunpack.c.h.b16 %v484
    %v678 = vunpack.c.l.b16 %v485
    %v679 = vunpack.c.h.b16 %v485
    %v680 = vunpack.c.l.b16 %v486
    %v681 = vunpack.c.h.b16 %v486
    %v682 = vunpack.c.l.b16 %v487
    %v683 = vunpack.c.h.b16 %v487
    %v684 = vunpack.c.l.b16 %v488
    %v685 = vunpack.c.h.b16 %v488
    %v686 = vunpack.c.l.b16 %v489
    %v687 = vunpack.c.h.b16 %v489
    %v688 = vunpack.c.l.b16 %v490
    %v689 = vunpack.c.h.b16 %v490
    %v690 = vunpack.c.l.b16 %v491
    %v691 = vunpack.c.h.b16 %v491
    %v692 = vunpack.c.l.b16 %v492
    %v693 = vunpack.c.h.b16 %v492
    %v694 = vunpack.c.l.b16 %v493
    %v695 = vunpack.c.h.b16 %v493
    %v696 = vunpack.c.l.b16 %v494
    %v697 = vunpack.c.h.b16 %v494
    %v698 = vpack.c.b16 %v572, %v570
    %v699 = vpack.c.b16 %v573, %v571
    %v700 = vpack.c.b16 %v576, %v574
    %v701 = vpack.c.b16 %v577, %v575
    %v702 = vpack.c.b16 %v580, %v578
    %v703 = vpack.c.b16 %v581, %v579
    %v704 = vpack.c.b16 %v584, %v582
    %v705 = vpack.c.b16 %v585, %v583
    %v706 = vpack.c.b16 %v588, %v586
    %v707 = vpack.c.b16 %v589, %v587
    %v708 = vpack.c.b16 %v592, %v590
    %v709 = vpack.c.b16 %v593, %v591
    %v710 = vpack.c.b16 %v596, %v594
    %v711 = vpack.c.b16 %v597, %v595
    %v712 = vpack.c.b16 %v600, %v598
    %v713 = vpack.c.b16 %v601, %v599
    %v714 = vpack.c.b16 %v604, %v602
    %v715 = vpack.c.b16 %v605, %v603
    %v716 = vpack.c.b16 %v608, %v606
    %v717 = vpack.c.b16 %v609, %v607
    %v718 = vpack.c.b16 %v612, %v610
    %v719 = vpack.c.b16 %v613, %v611
    %v720 = vpack.c.b16 %v616, %v614
    %v721 = vpack.c.b16 %v617, %v615
    %v722 = vpack.c.b16 %v620, %v618
    %v723 = vpack.c.b16 %v621, %v619
    %v724 = vpack.c.b16 %v624, %v622
    %v725 = vpack.c.b16 %v625, %v623
    %v726 = vpack.c.b16 %v628, %v626
    %v727 = vpack.c.b16 %v629, %v627
    %v728 = vpack.c.b16 %v632, %v630
    %v729 = vpack.c.b16 %v633, %v631
    %v730 = vpack.c.b16 %v636, %v634
    %v731 = vpack.c.b16 %v637, %v635
    %v732 = vpack.c.b16 %v640, %v638
    %v733 = vpack.c.b16 %v641, %v639
    %v734 = vpack.c.b16 %v644, %v642
    %v735 = vpack.c.b16 %v645, %v643
    %v736 = vpack.c.b16 %v648, %v646
    %v737 = vpack.c.b16 %v649, %v647
    %v738 = vpack.c.b16 %v652, %v650
    %v739 = vpack.c.b16 %v653, %v651
    %v740 = vpack.c.b16 %v656, %v654
    %v741 = vpack.c.b16 %v657, %v655
    %v742 = vpack.c.b16 %v660, %v658
    %v743 = vpack.c.b16 %v661, %v659
    %v744 = vpack.c.b16 %v664, %v662
    %v745 = vpack.c.b16 %v665, %v663
    %v746 = vpack.c.b16 %v668, %v666
    %v747 = vpack.c.b16 %v669, %v667
    %v748 = vpack.c.b16 %v672, %v670
    %v749 = vpack.c.b16 %v673, %v671
    %v750 = vpack.c.b16 %v676, %v674
    %v751 = vpack.c.b16 %v677, %v675
    %v752 = vpack.c.b16 %v680, %v678
    %v753 = vpack.c.b16 %v681, %v679
    %v754 = vpack.c.b16 %v684, %v682
    %v755 = vpack.c.b16 %v685, %v683
    %v756 = vpack.c.b16 %v688, %v686
    %v757 = vpack.c.b16 %v689, %v687
    %v758 = vpack.c.b16 %v692, %v690
    %v759 = vpack.c.b16 %v693, %v691
    %v760 = vpack.c.b16 %v696, %v694
    %v761 = vpack.c.b16 %v697, %v695
    %826 = vmatprep.subr.bf16.mxu0 %v713
    %827 = vmatpush1.bf16.msra.mxu0 %v712
    %828 = vmatprep.subr.bf16.mxu0 %v711
    %829 = vmatpush1.bf16.msra.mxu0 %v710
    %830 = vmatprep.subr.bf16.mxu0 %v709
    %831 = vmatpush1.bf16.msra.mxu0 %v708
    %832 = vmatprep.subr.bf16.mxu0 %v707
    %833 = vmatpush1.bf16.msra.mxu0 %v706
    %834 = vmatprep.subr.bf16.mxu0 %v705
    %835 = vmatpush1.bf16.msra.mxu0 %v704
    %836 = vmatprep.subr.bf16.mxu0 %v703
    %837 = vmatpush1.bf16.msra.mxu0 %v702
    %838 = vmatprep.subr.bf16.mxu0 %v701
    %839 = vmatpush1.bf16.msra.mxu0 %v700
    %840 = vmatprep.subr.bf16.mxu0 %v699
    %841 = vmatpush1.bf16.msra.mxu0 %v698
    %842 = vmatprep.subr.bf16.mxu0 %v729
    %843 = vmatpush2.bf16.msra.mxu0 %v728
    %844 = vmatprep.subr.bf16.mxu0 %v727
    %845 = vmatpush2.bf16.msra.mxu0 %v726
    %846 = vmatprep.subr.bf16.mxu0 %v725
    %847 = vmatpush2.bf16.msra.mxu0 %v724
    %848 = vmatprep.subr.bf16.mxu0 %v723
    %849 = vmatpush2.bf16.msra.mxu0 %v722
    %850 = vmatprep.subr.bf16.mxu0 %v721
    %851 = vmatpush2.bf16.msra.mxu0 %v720
    %852 = vmatprep.subr.bf16.mxu0 %v719
    %853 = vmatpush2.bf16.msra.mxu0 %v718
    %854 = vmatprep.subr.bf16.mxu0 %v717
    %855 = vmatpush2.bf16.msra.mxu0 %v716
    %856 = vmatprep.subr.bf16.mxu0 %v715
    %857 = vmatpush2.bf16.msra.mxu0 %v714
    %858 = vmatprep.mubr.bf16.mxu0 %v427
    %859 = vmatmul.mubr.bf16.gmra.mxu0 %v426
    %v860 = vpop.f32.mrf.mxu0
    %v861 = vadd.f32 %v499, %v860
    %v862 = vpop.f32.mrf.mxu0
    %v863 = vadd.f32 %v503, %v862
    %v864 = vpop.f32.mrf.mxu0
    %v865 = vadd.f32 %v499, %v864
    %v866 = vpop.f32.mrf.mxu0
    %v867 = vadd.f32 %v503, %v866
    %868 = vdwg.mxu0
    %869 = vmatprep.subr.bf16.mxu0 %v745
    %870 = vmatpush1.bf16.msra.mxu0 %v744
    %871 = vmatprep.subr.bf16.mxu0 %v743
    %872 = vmatpush1.bf16.msra.mxu0 %v742
    %873 = vmatprep.subr.bf16.mxu0 %v741
    %874 = vmatpush1.bf16.msra.mxu0 %v740
    %875 = vmatprep.subr.bf16.mxu0 %v739
    %876 = vmatpush1.bf16.msra.mxu0 %v738
    %877 = vmatprep.subr.bf16.mxu0 %v737
    %878 = vmatpush1.bf16.msra.mxu0 %v736
    %879 = vmatprep.subr.bf16.mxu0 %v735
    %880 = vmatpush1.bf16.msra.mxu0 %v734
    %881 = vmatprep.subr.bf16.mxu0 %v733
    %882 = vmatpush1.bf16.msra.mxu0 %v732
    %883 = vmatprep.subr.bf16.mxu0 %v731
    %884 = vmatpush1.bf16.msra.mxu0 %v730
    %885 = vmatprep.subr.bf16.mxu0 %v761
    %886 = vmatpush2.bf16.msra.mxu0 %v760
    %887 = vmatprep.subr.bf16.mxu0 %v759
    %888 = vmatpush2.bf16.msra.mxu0 %v758
    %889 = vmatprep.subr.bf16.mxu0 %v757
    %890 = vmatpush2.bf16.msra.mxu0 %v756
    %891 = vmatprep.subr.bf16.mxu0 %v755
    %892 = vmatpush2.bf16.msra.mxu0 %v754
    %893 = vmatprep.subr.bf16.mxu0 %v753
    %894 = vmatpush2.bf16.msra.mxu0 %v752
    %895 = vmatprep.subr.bf16.mxu0 %v751
    %896 = vmatpush2.bf16.msra.mxu0 %v750
    %897 = vmatprep.subr.bf16.mxu0 %v749
    %898 = vmatpush2.bf16.msra.mxu0 %v748
    %899 = vmatprep.subr.bf16.mxu0 %v747
    %900 = vmatpush2.bf16.msra.mxu0 %v746
    %901 = vmatprep.mubr.bf16.mxu0 %v429
    %902 = vmatmul.mubr.bf16.gmra.mxu0 %v428
    %v903 = vpop.f32.mrf.mxu0
    %v904 = vadd.f32 %v861, %v903
    %v905 = vpop.f32.mrf.mxu0
    %v906 = vadd.f32 %v863, %v905
    %v907 = vpop.f32.mrf.mxu0
    %v908 = vadd.f32 %v865, %v907
    %v909 = vpop.f32.mrf.mxu0
    %v910 = vadd.f32 %v867, %v909
    %911 = vdwg.mxu0
    %v912 = vmax.f32 %v904, 0.0
    %v913 = vmax.f32 %v906, 0.0
    %v914 = vmax.f32 %v908, 0.0
    %v915 = vmax.f32 %v910, 0.0
    %v916 = vpack.c.bf16 %v914, %v912
    %v917 = vpack.c.bf16 %v915, %v913
    %v918 = vld [vmem:[%s6 + $0x6] sm:$0x1]
    %v919 = vld [vmem:[#allocation8] sm:$0xf]
    %v920 = vld [vmem:[#allocation8 + $0x4] sm:$0xf]
    %v921 = vld [vmem:[#allocation8 + $0x8] sm:$0xf]
    %v922 = vld [vmem:[#allocation8 + $0xc] sm:$0xf]
    %v923 = vld [vmem:[#allocation8 + $0x10] sm:$0xf]
    %v924 = vld [vmem:[#allocation8 + $0x14] sm:$0xf]
    %v925 = vld [vmem:[#allocation8 + $0x18] sm:$0xf]
    %v926 = vld [vmem:[#allocation8 + $0x1c] sm:$0xf]
    %v927 = vld [vmem:[#allocation8 + $0x20] sm:$0xf]
    %v928 = vld [vmem:[#allocation8 + $0x24] sm:$0xf]
    %v929 = vld [vmem:[#allocation8 + $0x28] sm:$0xf]
    %v930 = vld [vmem:[#allocation8 + $0x2c] sm:$0xf]
    %v931 = vld [vmem:[#allocation8 + $0x30] sm:$0xf]
    %v932 = vld [vmem:[#allocation8 + $0x34] sm:$0xf]
    %v933 = vld [vmem:[#allocation8 + $0x38] sm:$0xf]
    %v934 = vld [vmem:[#allocation8 + $0x3c] sm:$0xf]
    %v935 = vld [vmem:[#allocation8 + $0x40] sm:$0xf]
    %v936 = vld [vmem:[#allocation8 + $0x44] sm:$0xf]
    %v937 = vld [vmem:[#allocation8 + $0x48] sm:$0xf]
    %v938 = vld [vmem:[#allocation8 + $0x4c] sm:$0xf]
    %v939 = vld [vmem:[#allocation8 + $0x50] sm:$0xf]
    %v940 = vld [vmem:[#allocation8 + $0x54] sm:$0xf]
    %v941 = vld [vmem:[#allocation8 + $0x58] sm:$0xf]
    %v942 = vld [vmem:[#allocation8 + $0x5c] sm:$0xf]
    %v943 = vld [vmem:[#allocation8 + $0x60] sm:$0xf]
    %v944 = vld [vmem:[#allocation8 + $0x64] sm:$0xf]
    %v945 = vld [vmem:[#allocation8 + $0x68] sm:$0xf]
    %v946 = vld [vmem:[#allocation8 + $0x6c] sm:$0xf]
    %v947 = vld [vmem:[#allocation8 + $0x70] sm:$0xf]
    %v948 = vld [vmem:[#allocation8 + $0x74] sm:$0xf]
    %v949 = vld [vmem:[#allocation8 + $0x78] sm:$0xf]
    %v950 = vld [vmem:[#allocation8 + $0x7c] sm:$0xf]
    %v952 = vlaneseq
    %v953 = vshrl.u32 %v952, 7
    %v954 = vsub.s32 0, %v953
    %v955 = vrot.slane %v918, %v954
    %v989 = vunpack.c.l.b16 %v919
    %v990 = vunpack.c.l.b16 %v920
    %v991 = vunpack.c.l.b16 %v921
    %v992 = vunpack.c.l.b16 %v922
    %v993 = vunpack.c.l.b16 %v923
    %v994 = vunpack.c.l.b16 %v924
    %v995 = vunpack.c.l.b16 %v925
    %v996 = vunpack.c.l.b16 %v926
    %v997 = vunpack.c.l.b16 %v927
    %v998 = vunpack.c.l.b16 %v928
    %v999 = vunpack.c.l.b16 %v929
    %v1000 = vunpack.c.l.b16 %v930
    %v1001 = vunpack.c.l.b16 %v931
    %v1002 = vunpack.c.l.b16 %v932
    %v1003 = vunpack.c.l.b16 %v933
    %v1004 = vunpack.c.l.b16 %v934
    %v1005 = vunpack.c.l.b16 %v935
    %v1006 = vunpack.c.l.b16 %v936
    %v1007 = vunpack.c.l.b16 %v937
    %v1008 = vunpack.c.l.b16 %v938
    %v1009 = vunpack.c.l.b16 %v939
    %v1010 = vunpack.c.l.b16 %v940
    %v1011 = vunpack.c.l.b16 %v941
    %v1012 = vunpack.c.l.b16 %v942
    %v1013 = vunpack.c.l.b16 %v943
    %v1014 = vunpack.c.l.b16 %v944
    %v1015 = vunpack.c.l.b16 %v945
    %v1016 = vunpack.c.l.b16 %v946
    %v1017 = vunpack.c.l.b16 %v947
    %v1018 = vunpack.c.l.b16 %v948
    %v1019 = vunpack.c.l.b16 %v949
    %v1020 = vunpack.c.l.b16 %v950
    %v1021 = vpack.c.b16 %v990, %v989
    %v1022 = vpack.c.b16 %v992, %v991
    %v1023 = vpack.c.b16 %v994, %v993
    %v1024 = vpack.c.b16 %v996, %v995
    %v1025 = vpack.c.b16 %v998, %v997
    %v1026 = vpack.c.b16 %v1000, %v999
    %v1027 = vpack.c.b16 %v1002, %v1001
    %v1028 = vpack.c.b16 %v1004, %v1003
    %v1029 = vpack.c.b16 %v1006, %v1005
    %v1030 = vpack.c.b16 %v1008, %v1007
    %v1031 = vpack.c.b16 %v1010, %v1009
    %v1032 = vpack.c.b16 %v1012, %v1011
    %v1033 = vpack.c.b16 %v1014, %v1013
    %v1034 = vpack.c.b16 %v1016, %v1015
    %v1035 = vpack.c.b16 %v1018, %v1017
    %v1036 = vpack.c.b16 %v1020, %v1019
    %1053 = vmatprep.subr.bf16.mxu0 0
    %1054 = vmatpush1.bf16.msra.mxu0 %v1028
    %1055 = vmatprep.subr.bf16.mxu0 0
    %1056 = vmatpush1.bf16.msra.mxu0 %v1027
    %1057 = vmatprep.subr.bf16.mxu0 0
    %1058 = vmatpush1.bf16.msra.mxu0 %v1026
    %1059 = vmatprep.subr.bf16.mxu0 0
    %1060 = vmatpush1.bf16.msra.mxu0 %v1025
    %1061 = vmatprep.subr.bf16.mxu0 0
    %1062 = vmatpush1.bf16.msra.mxu0 %v1024
    %1063 = vmatprep.subr.bf16.mxu0 0
    %1064 = vmatpush1.bf16.msra.mxu0 %v1023
    %1065 = vmatprep.subr.bf16.mxu0 0
    %1066 = vmatpush1.bf16.msra.mxu0 %v1022
    %1067 = vmatprep.subr.bf16.mxu0 0
    %1068 = vmatpush1.bf16.msra.mxu0 %v1021
    %1069 = vmatprep.subr.bf16.mxu0 0
    %1070 = vmatpush2.bf16.msra.mxu0 %v1036
    %1071 = vmatprep.subr.bf16.mxu0 0
    %1072 = vmatpush2.bf16.msra.mxu0 %v1035
    %1073 = vmatprep.subr.bf16.mxu0 0
    %1074 = vmatpush2.bf16.msra.mxu0 %v1034
    %1075 = vmatprep.subr.bf16.mxu0 0
    %1076 = vmatpush2.bf16.msra.mxu0 %v1033
    %1077 = vmatprep.subr.bf16.mxu0 0
    %1078 = vmatpush2.bf16.msra.mxu0 %v1032
    %1079 = vmatprep.subr.bf16.mxu0 0
    %1080 = vmatpush2.bf16.msra.mxu0 %v1031
    %1081 = vmatprep.subr.bf16.mxu0 0
    %1082 = vmatpush2.bf16.msra.mxu0 %v1030
    %1083 = vmatprep.subr.bf16.mxu0 0
    %1084 = vmatpush2.bf16.msra.mxu0 %v1029
    %1085 = vmatprep.mubr.bf16.mxu0 %v917
    %1086 = vmatmul.mubr.bf16.gmra.mxu0 %v916
    %v1087 = vpop.f32.mrf.mxu0
    %v1088 = vadd.f32 %v955, %v1087
    %v1089 = vpop.f32.mrf.mxu0
    %v1090 = vpop.f32.mrf.mxu0
    %v1091 = vadd.f32 %v955, %v1090
    %v1092 = vpop.f32.mrf.mxu0
    %1093 = vdwg.mxu0
    %v1094 = vmax.f32 %v1088, 0.0
    %v1095 = vmax.f32 %v1091, 0.0
    %v1096 = vpack.c.bf16 %v1095, %v1094
    %v1097 = vld [vmem:[%s6 + $0x7] sm:$0x1]
    %v1098 = vld [vmem:[#allocation10] sm:$0xf]
    %v1099 = vld [vmem:[#allocation10 + $0x4] sm:$0xf]
    %v1100 = vld [vmem:[#allocation10 + $0x8] sm:$0xf]
    %v1101 = vld [vmem:[#allocation10 + $0xc] sm:$0xf]
    %v1102 = vld [vmem:[#allocation10 + $0x10] sm:$0xf]
    %v1103 = vld [vmem:[#allocation10 + $0x14] sm:$0xf]
    %v1104 = vld [vmem:[#allocation10 + $0x18] sm:$0xf]
    %v1105 = vld [vmem:[#allocation10 + $0x1c] sm:$0xf]
    %v1106 = vld [vmem:[#allocation10 + $0x20] sm:$0xf]
    %v1107 = vld [vmem:[#allocation10 + $0x24] sm:$0xf]
    %v1108 = vld [vmem:[#allocation10 + $0x28] sm:$0xf]
    %v1109 = vld [vmem:[#allocation10 + $0x2c] sm:$0xf]
    %v1110 = vld [vmem:[#allocation10 + $0x30] sm:$0xf]
    %v1111 = vld [vmem:[#allocation10 + $0x34] sm:$0xf]
    %v1112 = vld [vmem:[#allocation10 + $0x38] sm:$0xf]
    %v1113 = vld [vmem:[#allocation10 + $0x3c] sm:$0xf]
    %v1115 = vlaneseq
    %v1116 = vshrl.u32 %v1115, 7
    %v1117 = vsub.s32 0, %v1116
    %v1118 = vrot.slane %v1097, %v1117
    %v1136 = vunpack.c.l.b16 %v1098
    %v1137 = vunpack.c.l.b16 %v1099
    %v1138 = vunpack.c.l.b16 %v1100
    %v1139 = vunpack.c.l.b16 %v1101
    %v1140 = vunpack.c.l.b16 %v1102
    %v1141 = vunpack.c.l.b16 %v1103
    %v1142 = vunpack.c.l.b16 %v1104
    %v1143 = vunpack.c.l.b16 %v1105
    %v1144 = vunpack.c.l.b16 %v1106
    %v1145 = vunpack.c.l.b16 %v1107
    %v1146 = vunpack.c.l.b16 %v1108
    %v1147 = vunpack.c.l.b16 %v1109
    %v1148 = vunpack.c.l.b16 %v1110
    %v1149 = vunpack.c.l.b16 %v1111
    %v1150 = vunpack.c.l.b16 %v1112
    %v1151 = vunpack.c.l.b16 %v1113
    %v1152 = vpack.c.b16 %v1137, %v1136
    %v1153 = vpack.c.b16 %v1139, %v1138
    %v1154 = vpack.c.b16 %v1141, %v1140
    %v1155 = vpack.c.b16 %v1143, %v1142
    %v1156 = vpack.c.b16 %v1145, %v1144
    %v1157 = vpack.c.b16 %v1147, %v1146
    %v1158 = vpack.c.b16 %v1149, %v1148
    %v1159 = vpack.c.b16 %v1151, %v1150
    %1168 = vmatprep.subr.bf16.mxu0 0
    %1169 = vmatpush1.bf16.msra.mxu0 %v1159
    %1170 = vmatprep.subr.bf16.mxu0 0
    %1171 = vmatpush1.bf16.msra.mxu0 %v1158
    %1172 = vmatprep.subr.bf16.mxu0 0
    %1173 = vmatpush1.bf16.msra.mxu0 %v1157
    %1174 = vmatprep.subr.bf16.mxu0 0
    %1175 = vmatpush1.bf16.msra.mxu0 %v1156
    %1176 = vmatprep.subr.bf16.mxu0 0
    %1177 = vmatpush1.bf16.msra.mxu0 %v1155
    %1178 = vmatprep.subr.bf16.mxu0 0
    %1179 = vmatpush1.bf16.msra.mxu0 %v1154
    %1180 = vmatprep.subr.bf16.mxu0 0
    %1181 = vmatpush1.bf16.msra.mxu0 %v1153
    %1182 = vmatprep.subr.bf16.mxu0 0
    %1183 = vmatpush1.bf16.msra.mxu0 %v1152
    %1184 = vmatprep.subr.bf16.mxu0 0
    %1185 = vmatpush2.bf16.msra.mxu0 0
    %1186 = vmatprep.subr.bf16.mxu0 0
    %1187 = vmatpush2.bf16.msra.mxu0 0
    %1188 = vmatprep.subr.bf16.mxu0 0
    %1189 = vmatpush2.bf16.msra.mxu0 0
    %1190 = vmatprep.subr.bf16.mxu0 0
    %1191 = vmatpush2.bf16.msra.mxu0 0
    %1192 = vmatprep.subr.bf16.mxu0 0
    %1193 = vmatpush2.bf16.msra.mxu0 0
    %1194 = vmatprep.subr.bf16.mxu0 0
    %1195 = vmatpush2.bf16.msra.mxu0 0
    %1196 = vmatprep.subr.bf16.mxu0 0
    %1197 = vmatpush2.bf16.msra.mxu0 0
    %1198 = vmatprep.subr.bf16.mxu0 0
    %1199 = vmatpush2.bf16.msra.mxu0 0
    %1200 = vmatprep.mubr.bf16.mxu0 0
    %1201 = vmatmul.mubr.bf16.gmra.mxu0 %v1096
    %v1202 = vpop.f32.mrf.mxu0
    %v1203 = vadd.f32 %v1118, %v1202
    %v1204 = vpop.f32.mrf.mxu0
    %v1205 = vpop.f32.mrf.mxu0
    %v1206 = vadd.f32 %v1118, %v1205
    %v1207 = vpop.f32.mrf.mxu0
    %1208 = vdwg.mxu0
    %v1209 = vmax.f32 %v1203, 0.0
    %v1210 = vmax.f32 %v1206, 0.0
    %v1211 = vpack.c.bf16 %v1210, %v1209
    %v1212 = vld [vmem:[%s6 + $0x8] sm:$0x1]
    %v1213 = vld [vmem:[#allocation11] sm:$0xf]
    %v1214 = vld [vmem:[#allocation11 + $0x4] sm:$0xf]
    %v1215 = vld [vmem:[#allocation11 + $0x8] sm:$0xf]
    %v1216 = vld [vmem:[#allocation11 + $0xc] sm:$0xf]
    %v1217 = vld [vmem:[#allocation11 + $0x10] sm:$0xf]
    %v1218 = vld [vmem:[#allocation11 + $0x14] sm:$0xf]
    %v1219 = vld [vmem:[#allocation11 + $0x18] sm:$0xf]
    %v1220 = vld [vmem:[#allocation11 + $0x1c] sm:$0xf]
    %v1221 = vld [vmem:[#allocation11 + $0x20] sm:$0xf]
    %v1222 = vld [vmem:[#allocation11 + $0x24] sm:$0xf]
    %v1223 = vld [vmem:[#allocation11 + $0x28] sm:$0xf]
    %v1224 = vld [vmem:[#allocation11 + $0x2c] sm:$0xf]
    %v1225 = vld [vmem:[#allocation11 + $0x30] sm:$0xf]
    %v1226 = vld [vmem:[#allocation11 + $0x34] sm:$0xf]
    %v1227 = vld [vmem:[#allocation11 + $0x38] sm:$0xf]
    %v1228 = vld [vmem:[#allocation11 + $0x3c] sm:$0xf]
    %v1230 = vlaneseq
    %v1231 = vshrl.u32 %v1230, 7
    %v1232 = vsub.s32 0, %v1231
    %v1233 = vrot.slane %v1212, %v1232
    %v1251 = vunpack.c.l.b16 %v1213
    %v1252 = vunpack.c.l.b16 %v1214
    %v1253 = vunpack.c.l.b16 %v1215
    %v1254 = vunpack.c.l.b16 %v1216
    %v1255 = vunpack.c.l.b16 %v1217
    %v1256 = vunpack.c.l.b16 %v1218
    %v1257 = vunpack.c.l.b16 %v1219
    %v1258 = vunpack.c.l.b16 %v1220
    %v1259 = vunpack.c.l.b16 %v1221
    %v1260 = vunpack.c.l.b16 %v1222
    %v1261 = vunpack.c.l.b16 %v1223
    %v1262 = vunpack.c.l.b16 %v1224
    %v1263 = vunpack.c.l.b16 %v1225
    %v1264 = vunpack.c.l.b16 %v1226
    %v1265 = vunpack.c.l.b16 %v1227
    %v1266 = vunpack.c.l.b16 %v1228
    %v1267 = vpack.c.b16 %v1252, %v1251
    %v1268 = vpack.c.b16 %v1254, %v1253
    %v1269 = vpack.c.b16 %v1256, %v1255
    %v1270 = vpack.c.b16 %v1258, %v1257
    %v1271 = vpack.c.b16 %v1260, %v1259
    %v1272 = vpack.c.b16 %v1262, %v1261
    %v1273 = vpack.c.b16 %v1264, %v1263
    %v1274 = vpack.c.b16 %v1266, %v1265
    %1283 = vmatprep.subr.bf16.mxu0 0
    %1284 = vmatpush1.bf16.msra.mxu0 %v1274
    %1285 = vmatprep.subr.bf16.mxu0 0
    %1286 = vmatpush1.bf16.msra.mxu0 %v1273
    %1287 = vmatprep.subr.bf16.mxu0 0
    %1288 = vmatpush1.bf16.msra.mxu0 %v1272
    %1289 = vmatprep.subr.bf16.mxu0 0
    %1290 = vmatpush1.bf16.msra.mxu0 %v1271
    %1291 = vmatprep.subr.bf16.mxu0 0
    %1292 = vmatpush1.bf16.msra.mxu0 %v1270
    %1293 = vmatprep.subr.bf16.mxu0 0
    %1294 = vmatpush1.bf16.msra.mxu0 %v1269
    %1295 = vmatprep.subr.bf16.mxu0 0
    %1296 = vmatpush1.bf16.msra.mxu0 %v1268
    %1297 = vmatprep.subr.bf16.mxu0 0
    %1298 = vmatpush1.bf16.msra.mxu0 %v1267
    %1299 = vmatprep.subr.bf16.mxu0 0
    %1300 = vmatpush2.bf16.msra.mxu0 0
    %1301 = vmatprep.subr.bf16.mxu0 0
    %1302 = vmatpush2.bf16.msra.mxu0 0
    %1303 = vmatprep.subr.bf16.mxu0 0
    %1304 = vmatpush2.bf16.msra.mxu0 0
    %1305 = vmatprep.subr.bf16.mxu0 0
    %1306 = vmatpush2.bf16.msra.mxu0 0
    %1307 = vmatprep.subr.bf16.mxu0 0
    %1308 = vmatpush2.bf16.msra.mxu0 0
    %1309 = vmatprep.subr.bf16.mxu0 0
    %1310 = vmatpush2.bf16.msra.mxu0 0
    %1311 = vmatprep.subr.bf16.mxu0 0
    %1312 = vmatpush2.bf16.msra.mxu0 0
    %1313 = vmatprep.subr.bf16.mxu0 0
    %1314 = vmatpush2.bf16.msra.mxu0 0
    %1315 = vmatprep.mubr.bf16.mxu0 0
    %1316 = vmatmul.mubr.bf16.gmra.mxu0 %v1211
    %v1317 = vpop.f32.mrf.mxu0
    %v1318 = vadd.f32 %v1233, %v1317
    %v1319 = vpop.f32.mrf.mxu0
    %v1320 = vpop.f32.mrf.mxu0
    %v1321 = vadd.f32 %v1233, %v1320
    %v1322 = vpop.f32.mrf.mxu0
    %1323 = vdwg.mxu0
    %1324 = vst [vmem:[#allocation13] sm:$0xff] %v1318
    %1325 = vst [vmem:[#allocation13 + $0x8] sm:$0xff] %v1321
    // Predicated region
    $region54: #{tpu_custom_call.1} parent=1 // pred_check
      _
    $region55: #{tpu_custom_call.1} parent=1 // pred_check_branch
      %1327 = sbr.rel (0) target = $region57
    $region56: #{tpu_custom_call.1} parent=1 // pred_region
      %s1329 = ssub.s32 256, 256
      %1330 = vsyncadd [#allocation4], %s1329
      %s1331 = sshll.u32 [#allocation13], 4
      %s1332 = int_to_ptr.vmem [resolvable:$true] %s1331
      %1337 = dma.vmem_to_hbm [thread:$0]  %s1332, 256, %s7, [#allocation4], 128, 128, 8
    $region57: #{tpu_custom_call.1} parent=1 // pred_fallthru
      _
    // Predicated region
    $region58: #{tpu_custom_call.1} parent=1 // pred_check
      _
    $region59: #{tpu_custom_call.1} parent=1 // pred_check_branch
      %1339 = sbr.rel (0) target = $region61
    $region60: #{tpu_custom_call.1} parent=1 // pred_region
      %1340 = dma.done [#allocation4], 256
    $region61: #{tpu_custom_call.1} parent=1 // pred_fallthru
      _
    %1341 = vsyncpa [#allocation3], 1
    %1342 = vsyncpa [#allocation6], 1
    %1343 = vsyncpa [#allocation9], 1
    %1344 = vsyncpa [#allocation12], 1
    %1345 = vsyncpa [#allocation4], 1

// kernel: tpu_custom_call.1
$region0: #{tpu_custom_call.1}
  #allocation0 [shape = 'u32[]', space=smem, size = 0x4, offset = 0x4, fixed_abs, tag = 'smem constant byte address 0x4 - core index']
  #allocation1 [shape = 'u32[144,128]{1,0:T(1,128)}', space=vmem, size = 0x12000, scoped, tag = 'internal scratch']
  %s0 = inlined_call_operand.hbm [shape: bf16[16,128], index: 0, kind: input, shape index: {}]
  %s1 = inlined_call_operand.hbm [shape: bf16[128,512], index: 1, kind: input, shape index: {}]
  %s2 = inlined_call_operand.hbm [shape: bf16[512,256], index: 2, kind: input, shape index: {}]
  %s3 = inlined_call_operand.hbm [shape: bf16[256,128], index: 3, kind: input, shape index: {}]
  %s4 = inlined_call_operand.hbm [shape: bf16[128,128], index: 4, kind: input, shape index: {}]
  %s5 = inlined_call_operand.hbm [shape: bf16[128,128], index: 5, kind: input, shape index: {}]
  %s6 = inlined_call_operand.vmem [shape: f32[1,1152], index: 6, kind: input, shape index: {}]
  %s7 = inlined_call_operand.hbm [shape: f32[16,128], index: 7, kind: output, shape index: {}]
  %s8 = sld [smem:[#allocation0]]
  $region62: #{tpu_custom_call.1} parent=0
    _
  %s10 = ssub.s32 1, %s8
  %s11 = scalar_select 0, %s10, %s8
  $region1: #{tpu_custom_call.1} parent=0
    #allocation2 [shape = 'u8[4096]{0}', space=vmem, size = 0x1000, scoped, tag = 'input window, operand 0, single buffered']
    #allocation3 [shape = 's32[1]{0}', space=sflag, size = 0x4, scoped, tag = 'scoped memory for tpu_custom_call.1']
    #allocation4 [shape = 's32[1]{0}', space=sflag, size = 0x4, scoped, tag = 'scoped memory for tpu_custom_call.1']
    #allocation5 [shape = 'u8[131072]{0}', space=vmem, size = 0x20000, scoped, tag = 'input window, operand 1, single buffered']
    #allocation6 [shape = 's32[1]{0}', space=sflag, size = 0x4, scoped, tag = 'scoped memory for tpu_custom_call.1']
    #allocation7 [shape = 'u8[262144]{0}', space=vmem, size = 0x40000, scoped, tag = 'input window, operand 2, single buffered']
    #allocation8 [shape = 'u8[65536]{0}', space=vmem, size = 0x10000, scoped, tag = 'input window, operand 3, single buffered']
    #allocation9 [shape = 's32[1]{0}', space=sflag, size = 0x4, scoped, tag = 'scoped memory for tpu_custom_call.1']
    #allocation10 [shape = 'u8[32768]{0}', space=vmem, size = 0x8000, scoped, tag = 'input window, operand 4, single buffered']
    #allocation11 [shape = 'u8[32768]{0}', space=vmem, size = 0x8000, scoped, tag = 'input window, operand 5, single buffered']
    #allocation12 [shape = 's32[1]{0}', space=sflag, size = 0x4, scoped, tag = 'scoped memory for tpu_custom_call.1']
    #allocation13 [shape = 'u8[8192]{0}', space=vmem, size = 0x2000, scoped, tag = 'output window, operand 0, single buffered']
    %12 = vsyncpa [#allocation3], 0
    %13 = vsyncpa [#allocation6], 0
    %14 = vsyncpa [#allocation9], 0
    %15 = vsyncpa [#allocation12], 0
    %16 = vsyncpa [#allocation4], 0
    // Predicated region
    $region2: #{tpu_custom_call.1} parent=1 // pred_check
      _
    $region3: #{tpu_custom_call.1} parent=1 // pred_check_branch
      %18 = sbr.rel (0) target = $region5
    $region4: #{tpu_custom_call.1} parent=1 // pred_region
      %s20 = ssub.s32 128, 128
      %21 = vsyncadd [#allocation3], %s20
      %s22 = sshll.u32 [#allocation2], 4
      %s23 = int_to_ptr.vmem [resolvable:$true] %s22
      %28 = dma.hbm_to_vmem [thread:$0]  %s0, 128, %s23, [#allocation3], 64, 64, 4
    $region5: #{tpu_custom_call.1} parent=1 // pred_fallthru
      _
    // Predicated region
    $region6: #{tpu_custom_call.1} parent=1 // pred_check
      _
    $region7: #{tpu_custom_call.1} parent=1 // pred_check_branch
      %30 = sbr.rel (0) target = $region9
    $region8: #{tpu_custom_call.1} parent=1 // pred_region
      %s32 = ssub.s32 4096, 4096
      %33 = vsyncadd [#allocation6], %s32
      %s34 = sshll.u32 [#allocation5], 4
      %s35 = int_to_ptr.vmem [resolvable:$true] %s34
      %40 = dma.hbm_to_vmem [thread:$0]  %s1, 4096, %s35, [#allocation6], 256, 256, 16
    $region9: #{tpu_custom_call.1} parent=1 // pred_fallthru
      _
    // Predicated region
    $region10: #{tpu_custom_call.1} parent=1 // pred_check
      _
    $region11: #{tpu_custom_call.1} parent=1 // pred_check_branch
      %42 = sbr.rel (0) target = $region13
    $region12: #{tpu_custom_call.1} parent=1 // pred_region
      %s44 = ssub.s32 8192, 8192
      %45 = vsyncadd [#allocation6], %s44
      %s46 = sshll.u32 [#allocation7], 4
      %s47 = int_to_ptr.vmem [resolvable:$true] %s46
      %52 = dma.hbm_to_vmem [thread:$0]  %s2, 8192, %s47, [#allocation6], 128, 128, 8
    $region13: #{tpu_custom_call.1} parent=1 // pred_fallthru
      _
    // Predicated region
    $region14: #{tpu_custom_call.1} parent=1 // pred_check
      _
    $region15: #{tpu_custom_call.1} parent=1 // pred_check_branch
      %54 = sbr.rel (0) target = $region17
    $region16: #{tpu_custom_call.1} parent=1 // pred_region
      %s56 = ssub.s32 2048, 2048
      %57 = vsyncadd [#allocation9], %s56
      %s58 = sshll.u32 [#allocation8], 4
      %s59 = int_to_ptr.vmem [resolvable:$true] %s58
      %64 = dma.hbm_to_vmem [thread:$0]  %s3, 2048, %s59, [#allocation9], 64, 64, 4
    $region17: #{tpu_custom_call.1} parent=1 // pred_fallthru
      _
    // Predicated region
    $region18: #{tpu_custom_call.1} parent=1 // pred_check
      _
    $region19: #{tpu_custom_call.1} parent=1 // pred_check_branch
      %66 = sbr.rel (0) target = $region21
    $region20: #{tpu_custom_call.1} parent=1 // pred_region
      %s68 = ssub.s32 1024, 1024
      %69 = vsyncadd [#allocation9], %s68
      %s70 = sshll.u32 [#allocation10], 4
      %s71 = int_to_ptr.vmem [resolvable:$true] %s70
      %76 = dma.hbm_to_vmem [thread:$0]  %s4, 1024, %s71, [#allocation9], 64, 64, 4
    $region21: #{tpu_custom_call.1} parent=1 // pred_fallthru
      _
    // Predicated region
    $region22: #{tpu_custom_call.1} parent=1 // pred_check
      _
    $region23: #{tpu_custom_call.1} parent=1 // pred_check_branch
      %78 = sbr.rel (0) target = $region25
    $region24: #{tpu_custom_call.1} parent=1 // pred_region
      %s80 = ssub.s32 1024, 1024
      %81 = vsyncadd [#allocation12], %s80
      %s82 = sshll.u32 [#allocation11], 4
      %s83 = int_to_ptr.vmem [resolvable:$true] %s82
      %88 = dma.hbm_to_vmem [thread:$0]  %s5, 1024, %s83, [#allocation12], 64, 64, 4
    $region25: #{tpu_custom_call.1} parent=1 // pred_fallthru
      _
    // Predicated region
    $region26: #{tpu_custom_call.1} parent=1 // pred_check
      _
    $region27: #{tpu_custom_call.1} parent=1 // pred_check_branch
      %90 = sbr.rel (0) target = $region29
    $region28: #{tpu_custom_call.1} parent=1 // pred_region
      _
    $region29: #{tpu_custom_call.1} parent=1 // pred_fallthru
      _
    // Predicated region
    $region30: #{tpu_custom_call.1} parent=1 // pred_check
      _
    $region31: #{tpu_custom_call.1} parent=1 // pred_check_branch
      %92 = sbr.rel (0) target = $region33
    $region32: #{tpu_custom_call.1} parent=1 // pred_region
      %93 = dma.done [#allocation3], 128
    $region33: #{tpu_custom_call.1} parent=1 // pred_fallthru
      _
    // Predicated region
    $region34: #{tpu_custom_call.1} parent=1 // pred_check
      _
    $region35: #{tpu_custom_call.1} parent=1 // pred_check_branch
      %95 = sbr.rel (0) target = $region37
    $region36: #{tpu_custom_call.1} parent=1 // pred_region
      %96 = dma.done [#allocation6], 4096
    $region37: #{tpu_custom_call.1} parent=1 // pred_fallthru
      _
    // Predicated region
    $region38: #{tpu_custom_call.1} parent=1 // pred_check
      _
    $region39: #{tpu_custom_call.1} parent=1 // pred_check_branch
      %98 = sbr.rel (0) target = $region41
    $region40: #{tpu_custom_call.1} parent=1 // pred_region
      %99 = dma.done [#allocation6], 8192
    $region41: #{tpu_custom_call.1} parent=1 // pred_fallthru
      _
    // Predicated region
    $region42: #{tpu_custom_call.1} parent=1 // pred_check
      _
    $region43: #{tpu_custom_call.1} parent=1 // pred_check_branch
      %101 = sbr.rel (0) target = $region45
    $region44: #{tpu_custom_call.1} parent=1 // pred_region
      %102 = dma.done [#allocation9], 2048
    $region45: #{tpu_custom_call.1} parent=1 // pred_fallthru
      _
    // Predicated region
    $region46: #{tpu_custom_call.1} parent=1 // pred_check
      _
    $region47: #{tpu_custom_call.1} parent=1 // pred_check_branch
      %104 = sbr.rel (0) target = $region49
    $region48: #{tpu_custom_call.1} parent=1 // pred_region
      %105 = dma.done [#allocation9], 1024
    $region49: #{tpu_custom_call.1} parent=1 // pred_fallthru
      _
    // Predicated region
    $region50: #{tpu_custom_call.1} parent=1 // pred_check
      _
    $region51: #{tpu_custom_call.1} parent=1 // pred_check_branch
      %107 = sbr.rel (0) target = $region53
    $region52: #{tpu_custom_call.1} parent=1 // pred_region
      %108 = dma.done [#allocation12], 1024
    $region53: #{tpu_custom_call.1} parent=1 // pred_fallthru
      _
    %v110 = vld [vmem:[#allocation2] sm:$0xf]
    %v111 = vld [vmem:[#allocation2 + $0x4] sm:$0xf]
    %v112 = vld [vmem:[%s6] sm:$0xf]
    %v113 = vld [vmem:[#allocation5] sm:$0xff]
    %v114 = vld [vmem:[#allocation5 + $0x8] sm:$0xff]
    %v115 = vld [vmem:[#allocation5 + $0x10] sm:$0xff]
    %v116 = vld [vmem:[#allocation5 + $0x18] sm:$0xff]
    %v117 = vld [vmem:[#allocation5 + $0x20] sm:$0xff]
    %v118 = vld [vmem:[#allocation5 + $0x28] sm:$0xff]
    %v119 = vld [vmem:[#allocation5 + $0x30] sm:$0xff]
    %v120 = vld [vmem:[#allocation5 + $0x38] sm:$0xff]
    %v121 = vld [vmem:[#allocation5 + $0x40] sm:$0xff]
    %v122 = vld [vmem:[#allocation5 + $0x48] sm:$0xff]
    %v123 = vld [vmem:[#allocation5 + $0x50] sm:$0xff]
    %v124 = vld [vmem:[#allocation5 + $0x58] sm:$0xff]
    %v125 = vld [vmem:[#allocation5 + $0x60] sm:$0xff]
    %v126 = vld [vmem:[#allocation5 + $0x68] sm:$0xff]
    %v127 = vld [vmem:[#allocation5 + $0x70] sm:$0xff]
    %v128 = vld [vmem:[#allocation5 + $0x78] sm:$0xff]
    %v129 = vld [vmem:[#allocation5 + $0x80] sm:$0xff]
    %v130 = vld [vmem:[#allocation5 + $0x88] sm:$0xff]
    %v131 = vld [vmem:[#allocation5 + $0x90] sm:$0xff]
    %v132 = vld [vmem:[#allocation5 + $0x98] sm:$0xff]
    %v133 = vld [vmem:[#allocation5 + $0xa0] sm:$0xff]
    %v134 = vld [vmem:[#allocation5 + $0xa8] sm:$0xff]
    %v135 = vld [vmem:[#allocation5 + $0xb0] sm:$0xff]
    %v136 = vld [vmem:[#allocation5 + $0xb8] sm:$0xff]
    %v137 = vld [vmem:[#allocation5 + $0xc0] sm:$0xff]
    %v138 = vld [vmem:[#allocation5 + $0xc8] sm:$0xff]
    %v139 = vld [vmem:[#allocation5 + $0xd0] sm:$0xff]
    %v140 = vld [vmem:[#allocation5 + $0xd8] sm:$0xff]
    %v141 = vld [vmem:[#allocation5 + $0xe0] sm:$0xff]
    %v142 = vld [vmem:[#allocation5 + $0xe8] sm:$0xff]
    %v143 = vld [vmem:[#allocation5 + $0xf0] sm:$0xff]
    %v144 = vld [vmem:[#allocation5 + $0xf8] sm:$0xff]
    %v146 = vlaneseq
    %v147 = vshrl.u32 %v146, 7
    %v148 = vsub.s32 0, %v147
    %v149 = vrot.slane %v112, %v148
    %v150 = vlaneseq
    %v151 = vshrl.u32 %v150, 7
    %v152 = vsub.s32 1, %v151
    %v153 = vrot.slane %v112, %v152
    %v154 = vlaneseq
    %v155 = vshrl.u32 %v154, 7
    %v156 = vsub.s32 2, %v155
    %v157 = vrot.slane %v112, %v156
    %v158 = vlaneseq
    %v159 = vshrl.u32 %v158, 7
    %v160 = vsub.s32 3, %v159
    %v161 = vrot.slane %v112, %v160
    %v168 = vunpack.c.l.b16 %v110
    %v169 = vunpack.c.l.b16 %v111
    %v170 = vpack.c.b16 %v169, %v168
    %v204 = vunpack.c.l.b16 %v113
    %v205 = vunpack.c.h.b16 %v113
    %v206 = vunpack.c.l.b16 %v114
    %v207 = vunpack.c.h.b16 %v114
    %v208 = vunpack.c.l.b16 %v115
    %v209 = vunpack.c.h.b16 %v115
    %v210 = vunpack.c.l.b16 %v116
    %v211 = vunpack.c.h.b16 %v116
    %v212 = vunpack.c.l.b16 %v117
    %v213 = vunpack.c.h.b16 %v117
    %v214 = vunpack.c.l.b16 %v118
    %v215 = vunpack.c.h.b16 %v118
    %v216 = vunpack.c.l.b16 %v119
    %v217 = vunpack.c.h.b16 %v119
    %v218 = vunpack.c.l.b16 %v120
    %v219 = vunpack.c.h.b16 %v120
    %v220 = vunpack.c.l.b16 %v121
    %v221 = vunpack.c.h.b16 %v121
    %v222 = vunpack.c.l.b16 %v122
    %v223 = vunpack.c.h.b16 %v122
    %v224 = vunpack.c.l.b16 %v123
    %v225 = vunpack.c.h.b16 %v123
    %v226 = vunpack.c.l.b16 %v124
    %v227 = vunpack.c.h.b16 %v124
    %v228 = vunpack.c.l.b16 %v125
    %v229 = vunpack.c.h.b16 %v125
    %v230 = vunpack.c.l.b16 %v126
    %v231 = vunpack.c.h.b16 %v126
    %v232 = vunpack.c.l.b16 %v127
    %v233 = vunpack.c.h.b16 %v127
    %v234 = vunpack.c.l.b16 %v128
    %v235 = vunpack.c.h.b16 %v128
    %v236 = vunpack.c.l.b16 %v129
    %v237 = vunpack.c.h.b16 %v129
    %v238 = vunpack.c.l.b16 %v130
    %v239 = vunpack.c.h.b16 %v130
    %v240 = vunpack.c.l.b16 %v131
    %v241 = vunpack.c.h.b16 %v131
    %v242 = vunpack.c.l.b16 %v132
    %v243 = vunpack.c.h.b16 %v132
    %v244 = vunpack.c.l.b16 %v133
    %v245 = vunpack.c.h.b16 %v133
    %v246 = vunpack.c.l.b16 %v134
    %v247 = vunpack.c.h.b16 %v134
    %v248 = vunpack.c.l.b16 %v135
    %v249 = vunpack.c.h.b16 %v135
    %v250 = vunpack.c.l.b16 %v136
    %v251 = vunpack.c.h.b16 %v136
    %v252 = vunpack.c.l.b16 %v137
    %v253 = vunpack.c.h.b16 %v137
    %v254 = vunpack.c.l.b16 %v138
    %v255 = vunpack.c.h.b16 %v138
    %v256 = vunpack.c.l.b16 %v139
    %v257 = vunpack.c.h.b16 %v139
    %v258 = vunpack.c.l.b16 %v140
    %v259 = vunpack.c.h.b16 %v140
    %v260 = vunpack.c.l.b16 %v141
    %v261 = vunpack.c.h.b16 %v141
    %v262 = vunpack.c.l.b16 %v142
    %v263 = vunpack.c.h.b16 %v142
    %v264 = vunpack.c.l.b16 %v143
    %v265 = vunpack.c.h.b16 %v143
    %v266 = vunpack.c.l.b16 %v144
    %v267 = vunpack.c.h.b16 %v144
    %v268 = vpack.c.b16 %v208, %v204
    %v269 = vpack.c.b16 %v209, %v205
    %v270 = vpack.c.b16 %v210, %v206
    %v271 = vpack.c.b16 %v211, %v207
    %v272 = vpack.c.b16 %v216, %v212
    %v273 = vpack.c.b16 %v217, %v213
    %v274 = vpack.c.b16 %v218, %v214
    %v275 = vpack.c.b16 %v219, %v215
    %v276 = vpack.c.b16 %v224, %v220
    %v277 = vpack.c.b16 %v225, %v221
    %v278 = vpack.c.b16 %v226, %v222
    %v279 = vpack.c.b16 %v227, %v223
    %v280 = vpack.c.b16 %v232, %v228
    %v281 = vpack.c.b16 %v233, %v229
    %v282 = vpack.c.b16 %v234, %v230
    %v283 = vpack.c.b16 %v235, %v231
    %v284 = vpack.c.b16 %v240, %v236
    %v285 = vpack.c.b16 %v241, %v237
    %v286 = vpack.c.b16 %v242, %v238
    %v287 = vpack.c.b16 %v243, %v239
    %v288 = vpack.c.b16 %v248, %v244
    %v289 = vpack.c.b16 %v249, %v245
    %v290 = vpack.c.b16 %v250, %v246
    %v291 = vpack.c.b16 %v251, %v247
    %v292 = vpack.c.b16 %v256, %v252
    %v293 = vpack.c.b16 %v257, %v253
    %v294 = vpack.c.b16 %v258, %v254
    %v295 = vpack.c.b16 %v259, %v255
    %v296 = vpack.c.b16 %v264, %v260
    %v297 = vpack.c.b16 %v265, %v261
    %v298 = vpack.c.b16 %v266, %v262
    %v299 = vpack.c.b16 %v267, %v263
    %332 = vmatprep.subr.bf16.mxu0 %v297
    %333 = vmatpush1.bf16.msra.mxu0 %v296
    %334 = vmatprep.subr.bf16.mxu0 %v293
    %335 = vmatpush1.bf16.msra.mxu0 %v292
    %336 = vmatprep.subr.bf16.mxu0 %v289
    %337 = vmatpush1.bf16.msra.mxu0 %v288
    %338 = vmatprep.subr.bf16.mxu0 %v285
    %339 = vmatpush1.bf16.msra.mxu0 %v284
    %340 = vmatprep.subr.bf16.mxu0 %v281
    %341 = vmatpush1.bf16.msra.mxu0 %v280
    %342 = vmatprep.subr.bf16.mxu0 %v277
    %343 = vmatpush1.bf16.msra.mxu0 %v276
    %344 = vmatprep.subr.bf16.mxu0 %v273
    %345 = vmatpush1.bf16.msra.mxu0 %v272
    %346 = vmatprep.subr.bf16.mxu0 %v269
    %347 = vmatpush1.bf16.msra.mxu0 %v268
    %348 = vmatprep.subr.bf16.mxu0 0
    %349 = vmatpush2.bf16.msra.mxu0 0
    %350 = vmatprep.subr.bf16.mxu0 0
    %351 = vmatpush2.bf16.msra.mxu0 0
    %352 = vmatprep.subr.bf16.mxu0 0
    %353 = vmatpush2.bf16.msra.mxu0 0
    %354 = vmatprep.subr.bf16.mxu0 0
    %355 = vmatpush2.bf16.msra.mxu0 0
    %356 = vmatprep.subr.bf16.mxu0 0
    %357 = vmatpush2.bf16.msra.mxu0 0
    %358 = vmatprep.subr.bf16.mxu0 0
    %359 = vmatpush2.bf16.msra.mxu0 0
    %360 = vmatprep.subr.bf16.mxu0 0
    %361 = vmatpush2.bf16.msra.mxu0 0
    %362 = vmatprep.subr.bf16.mxu0 0
    %363 = vmatpush2.bf16.msra.mxu0 0
    %364 = vmatprep.mubr.bf16.mxu0 0
    %365 = vmatmul.mubr.bf16.gmra.mxu0 %v170
    %v366 = vpop.f32.mrf.mxu0
    %v367 = vadd.f32 %v149, %v366
    %v368 = vpop.f32.mrf.mxu0
    %v369 = vadd.f32 %v153, %v368
    %v370 = vpop.f32.mrf.mxu0
    %v371 = vadd.f32 %v149, %v370
    %v372 = vpop.f32.mrf.mxu0
    %v373 = vadd.f32 %v153, %v372
    %374 = vdwg.mxu0
    %375 = vmatprep.subr.bf16.mxu0 %v299
    %376 = vmatpush1.bf16.msra.mxu0 %v298
    %377 = vmatprep.subr.bf16.mxu0 %v295
    %378 = vmatpush1.bf16.msra.mxu0 %v294
    %379 = vmatprep.subr.bf16.mxu0 %v291
    %380 = vmatpush1.bf16.msra.mxu0 %v290
    %381 = vmatprep.subr.bf16.mxu0 %v287
    %382 = vmatpush1.bf16.msra.mxu0 %v286
    %383 = vmatprep.subr.bf16.mxu0 %v283
    %384 = vmatpush1.bf16.msra.mxu0 %v282
    %385 = vmatprep.subr.bf16.mxu0 %v279
    %386 = vmatpush1.bf16.msra.mxu0 %v278
    %387 = vmatprep.subr.bf16.mxu0 %v275
    %388 = vmatpush1.bf16.msra.mxu0 %v274
    %389 = vmatprep.subr.bf16.mxu0 %v271
    %390 = vmatpush1.bf16.msra.mxu0 %v270
    %391 = vmatprep.subr.bf16.mxu0 0
    %392 = vmatpush2.bf16.msra.mxu0 0
    %393 = vmatprep.subr.bf16.mxu0 0
    %394 = vmatpush2.bf16.msra.mxu0 0
    %395 = vmatprep.subr.bf16.mxu0 0
    %396 = vmatpush2.bf16.msra.mxu0 0
    %397 = vmatprep.subr.bf16.mxu0 0
    %398 = vmatpush2.bf16.msra.mxu0 0
    %399 = vmatprep.subr.bf16.mxu0 0
    %400 = vmatpush2.bf16.msra.mxu0 0
    %401 = vmatprep.subr.bf16.mxu0 0
    %402 = vmatpush2.bf16.msra.mxu0 0
    %403 = vmatprep.subr.bf16.mxu0 0
    %404 = vmatpush2.bf16.msra.mxu0 0
    %405 = vmatprep.subr.bf16.mxu0 0
    %406 = vmatpush2.bf16.msra.mxu0 0
    %407 = vmatprep.mubr.bf16.mxu0 0
    %408 = vmatmul.mubr.bf16.gmra.mxu0 %v170
    %v409 = vpop.f32.mrf.mxu0
    %v410 = vadd.f32 %v157, %v409
    %v411 = vpop.f32.mrf.mxu0
    %v412 = vadd.f32 %v161, %v411
    %v413 = vpop.f32.mrf.mxu0
    %v414 = vadd.f32 %v157, %v413
    %v415 = vpop.f32.mrf.mxu0
    %v416 = vadd.f32 %v161, %v415
    %417 = vdwg.mxu0
    %v418 = vmax.f32 %v367, 0.0
    %v419 = vmax.f32 %v369, 0.0
    %v420 = vmax.f32 %v410, 0.0
    %v421 = vmax.f32 %v412, 0.0
    %v422 = vmax.f32 %v371, 0.0
    %v423 = vmax.f32 %v373, 0.0
    %v424 = vmax.f32 %v414, 0.0
    %v425 = vmax.f32 %v416, 0.0
    %v426 = vpack.c.bf16 %v422, %v418
    %v427 = vpack.c.bf16 %v423, %v419
    %v428 = vpack.c.bf16 %v424, %v420
    %v429 = vpack.c.bf16 %v425, %v421
    %v430 = vld [vmem:[%s6 + $0x4] sm:$0x3]
    %v431 = vld [vmem:[#allocation7] sm:$0xff]
    %v432 = vld [vmem:[#allocation7 + $0x8] sm:$0xff]
    %v433 = vld [vmem:[#allocation7 + $0x10] sm:$0xff]
    %v434 = vld [vmem:[#allocation7 + $0x18] sm:$0xff]
    %v435 = vld [vmem:[#allocation7 + $0x20] sm:$0xff]
    %v436 = vld [vmem:[#allocation7 + $0x28] sm:$0xff]
    %v437 = vld [vmem:[#allocation7 + $0x30] sm:$0xff]
    %v438 = vld [vmem:[#allocation7 + $0x38] sm:$0xff]
    %v439 = vld [vmem:[#allocation7 + $0x40] sm:$0xff]
    %v440 = vld [vmem:[#allocation7 + $0x48] sm:$0xff]
    %v441 = vld [vmem:[#allocation7 + $0x50] sm:$0xff]
    %v442 = vld [vmem:[#allocation7 + $0x58] sm:$0xff]
    %v443 = vld [vmem:[#allocation7 + $0x60] sm:$0xff]
    %v444 = vld [vmem:[#allocation7 + $0x68] sm:$0xff]
    %v445 = vld [vmem:[#allocation7 + $0x70] sm:$0xff]
    %v446 = vld [vmem:[#allocation7 + $0x78] sm:$0xff]
    %v447 = vld [vmem:[#allocation7 + $0x80] sm:$0xff]
    %v448 = vld [vmem:[#allocation7 + $0x88] sm:$0xff]
    %v449 = vld [vmem:[#allocation7 + $0x90] sm:$0xff]
    %v450 = vld [vmem:[#allocation7 + $0x98] sm:$0xff]
    %v451 = vld [vmem:[#allocation7 + $0xa0] sm:$0xff]
    %v452 = vld [vmem:[#allocation7 + $0xa8] sm:$0xff]
    %v453 = vld [vmem:[#allocation7 + $0xb0] sm:$0xff]
    %v454 = vld [vmem:[#allocation7 + $0xb8] sm:$0xff]
    %v455 = vld [vmem:[#allocation7 + $0xc0] sm:$0xff]
    %v456 = vld [vmem:[#allocation7 + $0xc8] sm:$0xff]
    %v457 = vld [vmem:[#allocation7 + $0xd0] sm:$0xff]
    %v458 = vld [vmem:[#allocation7 + $0xd8] sm:$0xff]
    %v459 = vld [vmem:[#allocation7 + $0xe0] sm:$0xff]
    %v460 = vld [vmem:[#allocation7 + $0xe8] sm:$0xff]
    %v461 = vld [vmem:[#allocation7 + $0xf0] sm:$0xff]
    %v462 = vld [vmem:[#allocation7 + $0xf8] sm:$0xff]
    %v463 = vld [vmem:[#allocation7 + $0x100] sm:$0xff]
    %v464 = vld [vmem:[#allocation7 + $0x108] sm:$0xff]
    %v465 = vld [vmem:[#allocation7 + $0x110] sm:$0xff]
    %v466 = vld [vmem:[#allocation7 + $0x118] sm:$0xff]
    %v467 = vld [vmem:[#allocation7 + $0x120] sm:$0xff]
    %v468 = vld [vmem:[#allocation7 + $0x128] sm:$0xff]
    %v469 = vld [vmem:[#allocation7 + $0x130] sm:$0xff]
    %v470 = vld [vmem:[#allocation7 + $0x138] sm:$0xff]
    %v471 = vld [vmem:[#allocation7 + $0x140] sm:$0xff]
    %v472 = vld [vmem:[#allocation7 + $0x148] sm:$0xff]
    %v473 = vld [vmem:[#allocation7 + $0x150] sm:$0xff]
    %v474 = vld [vmem:[#allocation7 + $0x158] sm:$0xff]
    %v475 = vld [vmem:[#allocation7 + $0x160] sm:$0xff]
    %v476 = vld [vmem:[#allocation7 + $0x168] sm:$0xff]
    %v477 = vld [vmem:[#allocation7 + $0x170] sm:$0xff]
    %v478 = vld [vmem:[#allocation7 + $0x178] sm:$0xff]
    %v479 = vld [vmem:[#allocation7 + $0x180] sm:$0xff]
    %v480 = vld [vmem:[#allocation7 + $0x188] sm:$0xff]
    %v481 = vld [vmem:[#allocation7 + $0x190] sm:$0xff]
    %v482 = vld [vmem:[#allocation7 + $0x198] sm:$0xff]
    %v483 = vld [vmem:[#allocation7 + $0x1a0] sm:$0xff]
    %v484 = vld [vmem:[#allocation7 + $0x1a8] sm:$0xff]
    %v485 = vld [vmem:[#allocation7 + $0x1b0] sm:$0xff]
    %v486 = vld [vmem:[#allocation7 + $0x1b8] sm:$0xff]
    %v487 = vld [vmem:[#allocation7 + $0x1c0] sm:$0xff]
    %v488 = vld [vmem:[#allocation7 + $0x1c8] sm:$0xff]
    %v489 = vld [vmem:[#allocation7 + $0x1d0] sm:$0xff]
    %v490 = vld [vmem:[#allocation7 + $0x1d8] sm:$0xff]
    %v491 = vld [vmem:[#allocation7 + $0x1e0] sm:$0xff]
    %v492 = vld [vmem:[#allocation7 + $0x1e8] sm:$0xff]
    %v493 = vld [vmem:[#allocation7 + $0x1f0] sm:$0xff]
    %v494 = vld [vmem:[#allocation7 + $0x1f8] sm:$0xff]
    %v496 = vlaneseq
    %v497 = vshrl.u32 %v496, 7
    %v498 = vsub.s32 0, %v497
    %v499 = vrot.slane %v430, %v498
    %v500 = vlaneseq
    %v501 = vshrl.u32 %v500, 7
    %v502 = vsub.s32 1, %v501
    %v503 = vrot.slane %v430, %v502
    %v570 = vunpack.c.l.b16 %v431
    %v571 = vunpack.c.h.b16 %v431
    %v572 = vunpack.c.l.b16 %v432
    %v573 = vunpack.c.h.b16 %v432
    %v574 = vunpack.c.l.b16 %v433
    %v575 = vunpack.c.h.b16 %v433
    %v576 = vunpack.c.l.b16 %v434
    %v577 = vunpack.c.h.b16 %v434
    %v578 = vunpack.c.l.b16 %v435
    %v579 = vunpack.c.h.b16 %v435
    %v580 = vunpack.c.l.b16 %v436
    %v581 = vunpack.c.h.b16 %v436
    %v582 = vunpack.c.l.b16 %v437
    %v583 = vunpack.c.h.b16 %v437
    %v584 = vunpack.c.l.b16 %v438
    %v585 = vunpack.c.h.b16 %v438
    %v586 = vunpack.c.l.b16 %v439
    %v587 = vunpack.c.h.b16 %v439
    %v588 = vunpack.c.l.b16 %v440
    %v589 = vunpack.c.h.b16 %v440
    %v590 = vunpack.c.l.b16 %v441
    %v591 = vunpack.c.h.b16 %v441
    %v592 = vunpack.c.l.b16 %v442
    %v593 = vunpack.c.h.b16 %v442
    %v594 = vunpack.c.l.b16 %v443
    %v595 = vunpack.c.h.b16 %v443
    %v596 = vunpack.c.l.b16 %v444
    %v597 = vunpack.c.h.b16 %v444
    %v598 = vunpack.c.l.b16 %v445
    %v599 = vunpack.c.h.b16 %v445
    %v600 = vunpack.c.l.b16 %v446
    %v601 = vunpack.c.h.b16 %v446
    %v602 = vunpack.c.l.b16 %v447
    %v603 = vunpack.c.h.b16 %v447
    %v604 = vunpack.c.l.b16 %v448
    %v605 = vunpack.c.h.b16 %v448
    %v606 = vunpack.c.l.b16 %v449
    %v607 = vunpack.c.h.b16 %v449
    %v608 = vunpack.c.l.b16 %v450
    %v609 = vunpack.c.h.b16 %v450
    %v610 = vunpack.c.l.b16 %v451
    %v611 = vunpack.c.h.b16 %v451
    %v612 = vunpack.c.l.b16 %v452
    %v613 = vunpack.c.h.b16 %v452
    %v614 = vunpack.c.l.b16 %v453
    %v615 = vunpack.c.h.b16 %v453
    %v616 = vunpack.c.l.b16 %v454
    %v617 = vunpack.c.h.b16 %v454
    %v618 = vunpack.c.l.b16 %v455
    %v619 = vunpack.c.h.b16 %v455
    %v620 = vunpack.c.l.b16 %v456
    %v621 = vunpack.c.h.b16 %v456
    %v622 = vunpack.c.l.b16 %v457
    %v623 = vunpack.c.h.b16 %v457
    %v624 = vunpack.c.l.b16 %v458
    %v625 = vunpack.c.h.b16 %v458
    %v626 = vunpack.c.l.b16 %v459
    %v627 = vunpack.c.h.b16 %v459
    %v628 = vunpack.c.l.b16 %v460
    %v629 = vunpack.c.h.b16 %v460
    %v630 = vunpack.c.l.b16 %v461
    %v631 = vunpack.c.h.b16 %v461
    %v632 = vunpack.c.l.b16 %v462
    %v633 = vunpack.c.h.b16 %v462
    %v634 = vunpack.c.l.b16 %v463
    %v635 = vunpack.c.h.b16 %v463
    %v636 = vunpack.c.l.b16 %v464
    %v637 = vunpack.c.h.b16 %v464
    %v638 = vunpack.c.l.b16 %v465
    %v639 = vunpack.c.h.b16 %v465
    %v640 = vunpack.c.l.b16 %v466
    %v641 = vunpack.c.h.b16 %v466
    %v642 = vunpack.c.l.b16 %v467
    %v643 = vunpack.c.h.b16 %v467
    %v644 = vunpack.c.l.b16 %v468
    %v645 = vunpack.c.h.b16 %v468
    %v646 = vunpack.c.l.b16 %v469
    %v647 = vunpack.c.h.b16 %v469
    %v648 = vunpack.c.l.b16 %v470
    %v649 = vunpack.c.h.b16 %v470
    %v650 = vunpack.c.l.b16 %v471
    %v651 = vunpack.c.h.b16 %v471
    %v652 = vunpack.c.l.b16 %v472
    %v653 = vunpack.c.h.b16 %v472
    %v654 = vunpack.c.l.b16 %v473
    %v655 = vunpack.c.h.b16 %v473
    %v656 = vunpack.c.l.b16 %v474
    %v657 = vunpack.c.h.b16 %v474
    %v658 = vunpack.c.l.b16 %v475
    %v659 = vunpack.c.h.b16 %v475
    %v660 = vunpack.c.l.b16 %v476
    %v661 = vunpack.c.h.b16 %v476
    %v662 = vunpack.c.l.b16 %v477
    %v663 = vunpack.c.h.b16 %v477
    %v664 = vunpack.c.l.b16 %v478
    %v665 = vunpack.c.h.b16 %v478
    %v666 = vunpack.c.l.b16 %v479
    %v667 = vunpack.c.h.b16 %v479
    %v668 = vunpack.c.l.b16 %v480
    %v669 = vunpack.c.h.b16 %v480
    %v670 = vunpack.c.l.b16 %v481
    %v671 = vunpack.c.h.b16 %v481
    %v672 = vunpack.c.l.b16 %v482
    %v673 = vunpack.c.h.b16 %v482
    %v674 = vunpack.c.l.b16 %v483
    %v675 = vunpack.c.h.b16 %v483
    %v676 = vunpack.c.l.b16 %v484
    %v677 = vunpack.c.h.b16 %v484
    %v678 = vunpack.c.l.b16 %v485
    %v679 = vunpack.c.h.b16 %v485
    %v680 = vunpack.c.l.b16 %v486
    %v681 = vunpack.c.h.b16 %v486
    %v682 = vunpack.c.l.b16 %v487
    %v683 = vunpack.c.h.b16 %v487
    %v684 = vunpack.c.l.b16 %v488
    %v685 = vunpack.c.h.b16 %v488
    %v686 = vunpack.c.l.b16 %v489
    %v687 = vunpack.c.h.b16 %v489
    %v688 = vunpack.c.l.b16 %v490
    %v689 = vunpack.c.h.b16 %v490
    %v690 = vunpack.c.l.b16 %v491
    %v691 = vunpack.c.h.b16 %v491
    %v692 = vunpack.c.l.b16 %v492
    %v693 = vunpack.c.h.b16 %v492
    %v694 = vunpack.c.l.b16 %v493
    %v695 = vunpack.c.h.b16 %v493
    %v696 = vunpack.c.l.b16 %v494
    %v697 = vunpack.c.h.b16 %v494
    %v698 = vpack.c.b16 %v572, %v570
    %v699 = vpack.c.b16 %v573, %v571
    %v700 = vpack.c.b16 %v576, %v574
    %v701 = vpack.c.b16 %v577, %v575
    %v702 = vpack.c.b16 %v580, %v578
    %v703 = vpack.c.b16 %v581, %v579
    %v704 = vpack.c.b16 %v584, %v582
    %v705 = vpack.c.b16 %v585, %v583
    %v706 = vpack.c.b16 %v588, %v586
    %v707 = vpack.c.b16 %v589, %v587
    %v708 = vpack.c.b16 %v592, %v590
    %v709 = vpack.c.b16 %v593, %v591
    %v710 = vpack.c.b16 %v596, %v594
    %v711 = vpack.c.b16 %v597, %v595
    %v712 = vpack.c.b16 %v600, %v598
    %v713 = vpack.c.b16 %v601, %v599
    %v714 = vpack.c.b16 %v604, %v602
    %v715 = vpack.c.b16 %v605, %v603
    %v716 = vpack.c.b16 %v608, %v606
    %v717 = vpack.c.b16 %v609, %v607
    %v718 = vpack.c.b16 %v612, %v610
    %v719 = vpack.c.b16 %v613, %v611
    %v720 = vpack.c.b16 %v616, %v614
    %v721 = vpack.c.b16 %v617, %v615
    %v722 = vpack.c.b16 %v620, %v618
    %v723 = vpack.c.b16 %v621, %v619
    %v724 = vpack.c.b16 %v624, %v622
    %v725 = vpack.c.b16 %v625, %v623
    %v726 = vpack.c.b16 %v628, %v626
    %v727 = vpack.c.b16 %v629, %v627
    %v728 = vpack.c.b16 %v632, %v630
    %v729 = vpack.c.b16 %v633, %v631
    %v730 = vpack.c.b16 %v636, %v634
    %v731 = vpack.c.b16 %v637, %v635
    %v732 = vpack.c.b16 %v640, %v638
    %v733 = vpack.c.b16 %v641, %v639
    %v734 = vpack.c.b16 %v644, %v642
    %v735 = vpack.c.b16 %v645, %v643
    %v736 = vpack.c.b16 %v648, %v646
    %v737 = vpack.c.b16 %v649, %v647
    %v738 = vpack.c.b16 %v652, %v650
    %v739 = vpack.c.b16 %v653, %v651
    %v740 = vpack.c.b16 %v656, %v654
    %v741 = vpack.c.b16 %v657, %v655
    %v742 = vpack.c.b16 %v660, %v658
    %v743 = vpack.c.b16 %v661, %v659
    %v744 = vpack.c.b16 %v664, %v662
    %v745 = vpack.c.b16 %v665, %v663
    %v746 = vpack.c.b16 %v668, %v666
    %v747 = vpack.c.b16 %v669, %v667
    %v748 = vpack.c.b16 %v672, %v670
    %v749 = vpack.c.b16 %v673, %v671
    %v750 = vpack.c.b16 %v676, %v674
    %v751 = vpack.c.b16 %v677, %v675
    %v752 = vpack.c.b16 %v680, %v678
    %v753 = vpack.c.b16 %v681, %v679
    %v754 = vpack.c.b16 %v684, %v682
    %v755 = vpack.c.b16 %v685, %v683
    %v756 = vpack.c.b16 %v688, %v686
    %v757 = vpack.c.b16 %v689, %v687
    %v758 = vpack.c.b16 %v692, %v690
    %v759 = vpack.c.b16 %v693, %v691
    %v760 = vpack.c.b16 %v696, %v694
    %v761 = vpack.c.b16 %v697, %v695
    %826 = vmatprep.subr.bf16.mxu0 %v713
    %827 = vmatpush1.bf16.msra.mxu0 %v712
    %828 = vmatprep.subr.bf16.mxu0 %v711
    %829 = vmatpush1.bf16.msra.mxu0 %v710
    %830 = vmatprep.subr.bf16.mxu0 %v709
    %831 = vmatpush1.bf16.msra.mxu0 %v708
    %832 = vmatprep.subr.bf16.mxu0 %v707
    %833 = vmatpush1.bf16.msra.mxu0 %v706
    %834 = vmatprep.subr.bf16.mxu0 %v705
    %835 = vmatpush1.bf16.msra.mxu0 %v704
    %836 = vmatprep.subr.bf16.mxu0 %v703
    %837 = vmatpush1.bf16.msra.mxu0 %v702
    %838 = vmatprep.subr.bf16.mxu0 %v701
    %839 = vmatpush1.bf16.msra.mxu0 %v700
    %840 = vmatprep.subr.bf16.mxu0 %v699
    %841 = vmatpush1.bf16.msra.mxu0 %v698
    %842 = vmatprep.subr.bf16.mxu0 %v729
    %843 = vmatpush2.bf16.msra.mxu0 %v728
    %844 = vmatprep.subr.bf16.mxu0 %v727
    %845 = vmatpush2.bf16.msra.mxu0 %v726
    %846 = vmatprep.subr.bf16.mxu0 %v725
    %847 = vmatpush2.bf16.msra.mxu0 %v724
    %848 = vmatprep.subr.bf16.mxu0 %v723
    %849 = vmatpush2.bf16.msra.mxu0 %v722
    %850 = vmatprep.subr.bf16.mxu0 %v721
    %851 = vmatpush2.bf16.msra.mxu0 %v720
    %852 = vmatprep.subr.bf16.mxu0 %v719
    %853 = vmatpush2.bf16.msra.mxu0 %v718
    %854 = vmatprep.subr.bf16.mxu0 %v717
    %855 = vmatpush2.bf16.msra.mxu0 %v716
    %856 = vmatprep.subr.bf16.mxu0 %v715
    %857 = vmatpush2.bf16.msra.mxu0 %v714
    %858 = vmatprep.mubr.bf16.mxu0 %v427
    %859 = vmatmul.mubr.bf16.gmra.mxu0 %v426
    %v860 = vpop.f32.mrf.mxu0
    %v861 = vadd.f32 %v499, %v860
    %v862 = vpop.f32.mrf.mxu0
    %v863 = vadd.f32 %v503, %v862
    %v864 = vpop.f32.mrf.mxu0
    %v865 = vadd.f32 %v499, %v864
    %v866 = vpop.f32.mrf.mxu0
    %v867 = vadd.f32 %v503, %v866
    %868 = vdwg.mxu0
    %869 = vmatprep.subr.bf16.mxu0 %v745
    %870 = vmatpush1.bf16.msra.mxu0 %v744
    %871 = vmatprep.subr.bf16.mxu0 %v743
    %872 = vmatpush1.bf16.msra.mxu0 %v742
    %873 = vmatprep.subr.bf16.mxu0 %v741
    %874 = vmatpush1.bf16.msra.mxu0 %v740
    %875 = vmatprep.subr.bf16.mxu0 %v739
    %876 = vmatpush1.bf16.msra.mxu0 %v738
    %877 = vmatprep.subr.bf16.mxu0 %v737
    %878 = vmatpush1.bf16.msra.mxu0 %v736
    %879 = vmatprep.subr.bf16.mxu0 %v735
    %880 = vmatpush1.bf16.msra.mxu0 %v734
    %881 = vmatprep.subr.bf16.mxu0 %v733
    %882 = vmatpush1.bf16.msra.mxu0 %v732
    %883 = vmatprep.subr.bf16.mxu0 %v731
    %884 = vmatpush1.bf16.msra.mxu0 %v730
    %885 = vmatprep.subr.bf16.mxu0 %v761
    %886 = vmatpush2.bf16.msra.mxu0 %v760
    %887 = vmatprep.subr.bf16.mxu0 %v759
    %888 = vmatpush2.bf16.msra.mxu0 %v758
    %889 = vmatprep.subr.bf16.mxu0 %v757
    %890 = vmatpush2.bf16.msra.mxu0 %v756
    %891 = vmatprep.subr.bf16.mxu0 %v755
    %892 = vmatpush2.bf16.msra.mxu0 %v754
    %893 = vmatprep.subr.bf16.mxu0 %v753
    %894 = vmatpush2.bf16.msra.mxu0 %v752
    %895 = vmatprep.subr.bf16.mxu0 %v751
    %896 = vmatpush2.bf16.msra.mxu0 %v750
    %897 = vmatprep.subr.bf16.mxu0 %v749
    %898 = vmatpush2.bf16.msra.mxu0 %v748
    %899 = vmatprep.subr.bf16.mxu0 %v747
    %900 = vmatpush2.bf16.msra.mxu0 %v746
    %901 = vmatprep.mubr.bf16.mxu0 %v429
    %902 = vmatmul.mubr.bf16.gmra.mxu0 %v428
    %v903 = vpop.f32.mrf.mxu0
    %v904 = vadd.f32 %v861, %v903
    %v905 = vpop.f32.mrf.mxu0
    %v906 = vadd.f32 %v863, %v905
    %v907 = vpop.f32.mrf.mxu0
    %v908 = vadd.f32 %v865, %v907
    %v909 = vpop.f32.mrf.mxu0
    %v910 = vadd.f32 %v867, %v909
    %911 = vdwg.mxu0
    %v912 = vmax.f32 %v904, 0.0
    %v913 = vmax.f32 %v906, 0.0
    %v914 = vmax.f32 %v908, 0.0
    %v915 = vmax.f32 %v910, 0.0
    %v916 = vpack.c.bf16 %v914, %v912
    %v917 = vpack.c.bf16 %v915, %v913
    %v918 = vld [vmem:[%s6 + $0x6] sm:$0x1]
    %v919 = vld [vmem:[#allocation8] sm:$0xf]
    %v920 = vld [vmem:[#allocation8 + $0x4] sm:$0xf]
    %v921 = vld [vmem:[#allocation8 + $0x8] sm:$0xf]
    %v922 = vld [vmem:[#allocation8 + $0xc] sm:$0xf]
    %v923 = vld [vmem:[#allocation8 + $0x10] sm:$0xf]
    %v924 = vld [vmem:[#allocation8 + $0x14] sm:$0xf]
    %v925 = vld [vmem:[#allocation8 + $0x18] sm:$0xf]
    %v926 = vld [vmem:[#allocation8 + $0x1c] sm:$0xf]
    %v927 = vld [vmem:[#allocation8 + $0x20] sm:$0xf]
    %v928 = vld [vmem:[#allocation8 + $0x24] sm:$0xf]
    %v929 = vld [vmem:[#allocation8 + $0x28] sm:$0xf]
    %v930 = vld [vmem:[#allocation8 + $0x2c] sm:$0xf]
    %v931 = vld [vmem:[#allocation8 + $0x30] sm:$0xf]
    %v932 = vld [vmem:[#allocation8 + $0x34] sm:$0xf]
    %v933 = vld [vmem:[#allocation8 + $0x38] sm:$0xf]
    %v934 = vld [vmem:[#allocation8 + $0x3c] sm:$0xf]
    %v935 = vld [vmem:[#allocation8 + $0x40] sm:$0xf]
    %v936 = vld [vmem:[#allocation8 + $0x44] sm:$0xf]
    %v937 = vld [vmem:[#allocation8 + $0x48] sm:$0xf]
    %v938 = vld [vmem:[#allocation8 + $0x4c] sm:$0xf]
    %v939 = vld [vmem:[#allocation8 + $0x50] sm:$0xf]
    %v940 = vld [vmem:[#allocation8 + $0x54] sm:$0xf]
    %v941 = vld [vmem:[#allocation8 + $0x58] sm:$0xf]
    %v942 = vld [vmem:[#allocation8 + $0x5c] sm:$0xf]
    %v943 = vld [vmem:[#allocation8 + $0x60] sm:$0xf]
    %v944 = vld [vmem:[#allocation8 + $0x64] sm:$0xf]
    %v945 = vld [vmem:[#allocation8 + $0x68] sm:$0xf]
    %v946 = vld [vmem:[#allocation8 + $0x6c] sm:$0xf]
    %v947 = vld [vmem:[#allocation8 + $0x70] sm:$0xf]
    %v948 = vld [vmem:[#allocation8 + $0x74] sm:$0xf]
    %v949 = vld [vmem:[#allocation8 + $0x78] sm:$0xf]
    %v950 = vld [vmem:[#allocation8 + $0x7c] sm:$0xf]
    %v952 = vlaneseq
    %v953 = vshrl.u32 %v952, 7
    %v954 = vsub.s32 0, %v953
    %v955 = vrot.slane %v918, %v954
    %v989 = vunpack.c.l.b16 %v919
    %v990 = vunpack.c.l.b16 %v920
    %v991 = vunpack.c.l.b16 %v921
    %v992 = vunpack.c.l.b16 %v922
    %v993 = vunpack.c.l.b16 %v923
    %v994 = vunpack.c.l.b16 %v924
    %v995 = vunpack.c.l.b16 %v925
    %v996 = vunpack.c.l.b16 %v926
    %v997 = vunpack.c.l.b16 %v927
    %v998 = vunpack.c.l.b16 %v928
    %v999 = vunpack.c.l.b16 %v929
    %v1000 = vunpack.c.l.b16 %v930
    %v1001 = vunpack.c.l.b16 %v931
    %v1002 = vunpack.c.l.b16 %v932
    %v1003 = vunpack.c.l.b16 %v933
    %v1004 = vunpack.c.l.b16 %v934
    %v1005 = vunpack.c.l.b16 %v935
    %v1006 = vunpack.c.l.b16 %v936
    %v1007 = vunpack.c.l.b16 %v937
    %v1008 = vunpack.c.l.b16 %v938
    %v1009 = vunpack.c.l.b16 %v939
    %v1010 = vunpack.c.l.b16 %v940
    %v1011 = vunpack.c.l.b16 %v941
    %v1012 = vunpack.c.l.b16 %v942
    %v1013 = vunpack.c.l.b16 %v943
    %v1014 = vunpack.c.l.b16 %v944
    %v1015 = vunpack.c.l.b16 %v945
    %v1016 = vunpack.c.l.b16 %v946
    %v1017 = vunpack.c.l.b16 %v947
    %v1018 = vunpack.c.l.b16 %v948
    %v1019 = vunpack.c.l.b16 %v949
    %v1020 = vunpack.c.l.b16 %v950
    %v1021 = vpack.c.b16 %v990, %v989
    %v1022 = vpack.c.b16 %v992, %v991
    %v1023 = vpack.c.b16 %v994, %v993
    %v1024 = vpack.c.b16 %v996, %v995
    %v1025 = vpack.c.b16 %v998, %v997
    %v1026 = vpack.c.b16 %v1000, %v999
    %v1027 = vpack.c.b16 %v1002, %v1001
    %v1028 = vpack.c.b16 %v1004, %v1003
    %v1029 = vpack.c.b16 %v1006, %v1005
    %v1030 = vpack.c.b16 %v1008, %v1007
    %v1031 = vpack.c.b16 %v1010, %v1009
    %v1032 = vpack.c.b16 %v1012, %v1011
    %v1033 = vpack.c.b16 %v1014, %v1013
    %v1034 = vpack.c.b16 %v1016, %v1015
    %v1035 = vpack.c.b16 %v1018, %v1017
    %v1036 = vpack.c.b16 %v1020, %v1019
    %1053 = vmatprep.subr.bf16.mxu0 0
    %1054 = vmatpush1.bf16.msra.mxu0 %v1028
    %1055 = vmatprep.subr.bf16.mxu0 0
    %1056 = vmatpush1.bf16.msra.mxu0 %v1027
    %1057 = vmatprep.subr.bf16.mxu0 0
    %1058 = vmatpush1.bf16.msra.mxu0 %v1026
    %1059 = vmatprep.subr.bf16.mxu0 0
    %1060 = vmatpush1.bf16.msra.mxu0 %v1025
    %1061 = vmatprep.subr.bf16.mxu0 0
    %1062 = vmatpush1.bf16.msra.mxu0 %v1024
    %1063 = vmatprep.subr.bf16.mxu0 0
    %1064 = vmatpush1.bf16.msra.mxu0 %v1023
    %1065 = vmatprep.subr.bf16.mxu0 0
    %1066 = vmatpush1.bf16.msra.mxu0 %v1022
    %1067 = vmatprep.subr.bf16.mxu0 0
    %1068 = vmatpush1.bf16.msra.mxu0 %v1021
    %1069 = vmatprep.subr.bf16.mxu0 0
    %1070 = vmatpush2.bf16.msra.mxu0 %v1036
    %1071 = vmatprep.subr.bf16.mxu0 0
    %1072 = vmatpush2.bf16.msra.mxu0 %v1035
    %1073 = vmatprep.subr.bf16.mxu0 0
    %1074 = vmatpush2.bf16.msra.mxu0 %v1034
    %1075 = vmatprep.subr.bf16.mxu0 0
    %1076 = vmatpush2.bf16.msra.mxu0 %v1033
    %1077 = vmatprep.subr.bf16.mxu0 0
    %1078 = vmatpush2.bf16.msra.mxu0 %v1032
    %1079 = vmatprep.subr.bf16.mxu0 0
    %1080 = vmatpush2.bf16.msra.mxu0 %v1031
    %1081 = vmatprep.subr.bf16.mxu0 0
    %1082 = vmatpush2.bf16.msra.mxu0 %v1030
    %1083 = vmatprep.subr.bf16.mxu0 0
    %1084 = vmatpush2.bf16.msra.mxu0 %v1029
    %1085 = vmatprep.mubr.bf16.mxu0 %v917
    %1086 = vmatmul.mubr.bf16.gmra.mxu0 %v916
    %v1087 = vpop.f32.mrf.mxu0
    %v1088 = vadd.f32 %v955, %v1087
    %v1089 = vpop.f32.mrf.mxu0
    %v1090 = vpop.f32.mrf.mxu0
    %v1091 = vadd.f32 %v955, %v1090
    %v1092 = vpop.f32.mrf.mxu0
    %1093 = vdwg.mxu0
    %v1094 = vmax.f32 %v1088, 0.0
    %v1095 = vmax.f32 %v1091, 0.0
    %v1096 = vpack.c.bf16 %v1095, %v1094
    %v1097 = vld [vmem:[%s6 + $0x7] sm:$0x1]
    %v1098 = vld [vmem:[#allocation10] sm:$0xf]
    %v1099 = vld [vmem:[#allocation10 + $0x4] sm:$0xf]
    %v1100 = vld [vmem:[#allocation10 + $0x8] sm:$0xf]
    %v1101 = vld [vmem:[#allocation10 + $0xc] sm:$0xf]
    %v1102 = vld [vmem:[#allocation10 + $0x10] sm:$0xf]
    %v1103 = vld [vmem:[#allocation10 + $0x14] sm:$0xf]
    %v1104 = vld [vmem:[#allocation10 + $0x18] sm:$0xf]
    %v1105 = vld [vmem:[#allocation10 + $0x1c] sm:$0xf]
    %v1106 = vld [vmem:[#allocation10 + $0x20] sm:$0xf]
    %v1107 = vld [vmem:[#allocation10 + $0x24] sm:$0xf]
    %v1108 = vld [vmem:[#allocation10 + $0x28] sm:$0xf]
    %v1109 = vld [vmem:[#allocation10 + $0x2c] sm:$0xf]
    %v1110 = vld [vmem:[#allocation10 + $0x30] sm:$0xf]
    %v1111 = vld [vmem:[#allocation10 + $0x34] sm:$0xf]
    %v1112 = vld [vmem:[#allocation10 + $0x38] sm:$0xf]
    %v1113 = vld [vmem:[#allocation10 + $0x3c] sm:$0xf]
    %v1115 = vlaneseq
    %v1116 = vshrl.u32 %v1115, 7
    %v1117 = vsub.s32 0, %v1116
    %v1118 = vrot.slane %v1097, %v1117
    %v1136 = vunpack.c.l.b16 %v1098
    %v1137 = vunpack.c.l.b16 %v1099
    %v1138 = vunpack.c.l.b16 %v1100
    %v1139 = vunpack.c.l.b16 %v1101
    %v1140 = vunpack.c.l.b16 %v1102
    %v1141 = vunpack.c.l.b16 %v1103
    %v1142 = vunpack.c.l.b16 %v1104
    %v1143 = vunpack.c.l.b16 %v1105
    %v1144 = vunpack.c.l.b16 %v1106
    %v1145 = vunpack.c.l.b16 %v1107
    %v1146 = vunpack.c.l.b16 %v1108
    %v1147 = vunpack.c.l.b16 %v1109
    %v1148 = vunpack.c.l.b16 %v1110
    %v1149 = vunpack.c.l.b16 %v1111
    %v1150 = vunpack.c.l.b16 %v1112
    %v1151 = vunpack.c.l.b16 %v1113
    %v1152 = vpack.c.b16 %v1137, %v1136
    %v1153 = vpack.c.b16 %v1139, %v1138
    %v1154 = vpack.c.b16 %v1141, %v1140
    %v1155 = vpack.c.b16 %v1143, %v1142
    %v1156 = vpack.c.b16 %v1145, %v1144
    %v1157 = vpack.c.b16 %v1147, %v1146
    %v1158 = vpack.c.b16 %v1149, %v1148
    %v1159 = vpack.c.b16 %v1151, %v1150
    %1168 = vmatprep.subr.bf16.mxu0 0
    %1169 = vmatpush1.bf16.msra.mxu0 %v1159
    %1170 = vmatprep.subr.bf16.mxu0 0
    %1171 = vmatpush1.bf16.msra.mxu0 %v1158
    %1172 = vmatprep.subr.bf16.mxu0 0
    %1173 = vmatpush1.bf16.msra.mxu0 %v1157
    %1174 = vmatprep.subr.bf16.mxu0 0
    %1175 = vmatpush1.bf16.msra.mxu0 %v1156
    %1176 = vmatprep.subr.bf16.mxu0 0
    %1177 = vmatpush1.bf16.msra.mxu0 %v1155
    %1178 = vmatprep.subr.bf16.mxu0 0
    %1179 = vmatpush1.bf16.msra.mxu0 %v1154
    %1180 = vmatprep.subr.bf16.mxu0 0
    %1181 = vmatpush1.bf16.msra.mxu0 %v1153
    %1182 = vmatprep.subr.bf16.mxu0 0
    %1183 = vmatpush1.bf16.msra.mxu0 %v1152
    %1184 = vmatprep.subr.bf16.mxu0 0
    %1185 = vmatpush2.bf16.msra.mxu0 0
    %1186 = vmatprep.subr.bf16.mxu0 0
    %1187 = vmatpush2.bf16.msra.mxu0 0
    %1188 = vmatprep.subr.bf16.mxu0 0
    %1189 = vmatpush2.bf16.msra.mxu0 0
    %1190 = vmatprep.subr.bf16.mxu0 0
    %1191 = vmatpush2.bf16.msra.mxu0 0
    %1192 = vmatprep.subr.bf16.mxu0 0
    %1193 = vmatpush2.bf16.msra.mxu0 0
    %1194 = vmatprep.subr.bf16.mxu0 0
    %1195 = vmatpush2.bf16.msra.mxu0 0
    %1196 = vmatprep.subr.bf16.mxu0 0
    %1197 = vmatpush2.bf16.msra.mxu0 0
    %1198 = vmatprep.subr.bf16.mxu0 0
    %1199 = vmatpush2.bf16.msra.mxu0 0
    %1200 = vmatprep.mubr.bf16.mxu0 0
    %1201 = vmatmul.mubr.bf16.gmra.mxu0 %v1096
    %v1202 = vpop.f32.mrf.mxu0
    %v1203 = vadd.f32 %v1118, %v1202
    %v1204 = vpop.f32.mrf.mxu0
    %v1205 = vpop.f32.mrf.mxu0
    %v1206 = vadd.f32 %v1118, %v1205
    %v1207 = vpop.f32.mrf.mxu0
    %1208 = vdwg.mxu0
    %v1209 = vmax.f32 %v1203, 0.0
    %v1210 = vmax.f32 %v1206, 0.0
    %v1211 = vpack.c.bf16 %v1210, %v1209
    %v1212 = vld [vmem:[%s6 + $0x8] sm:$0x1]
    %v1213 = vld [vmem:[#allocation11] sm:$0xf]
    %v1214 = vld [vmem:[#allocation11 + $0x4] sm:$0xf]
    %v1215 = vld [vmem:[#allocation11 + $0x8] sm:$0xf]
    %v1216 = vld [vmem:[#allocation11 + $0xc] sm:$0xf]
    %v1217 = vld [vmem:[#allocation11 + $0x10] sm:$0xf]
    %v1218 = vld [vmem:[#allocation11 + $0x14] sm:$0xf]
    %v1219 = vld [vmem:[#allocation11 + $0x18] sm:$0xf]
    %v1220 = vld [vmem:[#allocation11 + $0x1c] sm:$0xf]
    %v1221 = vld [vmem:[#allocation11 + $0x20] sm:$0xf]
    %v1222 = vld [vmem:[#allocation11 + $0x24] sm:$0xf]
    %v1223 = vld [vmem:[#allocation11 + $0x28] sm:$0xf]
    %v1224 = vld [vmem:[#allocation11 + $0x2c] sm:$0xf]
    %v1225 = vld [vmem:[#allocation11 + $0x30] sm:$0xf]
    %v1226 = vld [vmem:[#allocation11 + $0x34] sm:$0xf]
    %v1227 = vld [vmem:[#allocation11 + $0x38] sm:$0xf]
    %v1228 = vld [vmem:[#allocation11 + $0x3c] sm:$0xf]
    %v1230 = vlaneseq
    %v1231 = vshrl.u32 %v1230, 7
    %v1232 = vsub.s32 0, %v1231
    %v1233 = vrot.slane %v1212, %v1232
    %v1251 = vunpack.c.l.b16 %v1213
    %v1252 = vunpack.c.l.b16 %v1214
    %v1253 = vunpack.c.l.b16 %v1215
    %v1254 = vunpack.c.l.b16 %v1216
    %v1255 = vunpack.c.l.b16 %v1217
    %v1256 = vunpack.c.l.b16 %v1218
    %v1257 = vunpack.c.l.b16 %v1219
    %v1258 = vunpack.c.l.b16 %v1220
    %v1259 = vunpack.c.l.b16 %v1221
    %v1260 = vunpack.c.l.b16 %v1222
    %v1261 = vunpack.c.l.b16 %v1223
    %v1262 = vunpack.c.l.b16 %v1224
    %v1263 = vunpack.c.l.b16 %v1225
    %v1264 = vunpack.c.l.b16 %v1226
    %v1265 = vunpack.c.l.b16 %v1227
    %v1266 = vunpack.c.l.b16 %v1228
    %v1267 = vpack.c.b16 %v1252, %v1251
    %v1268 = vpack.c.b16 %v1254, %v1253
    %v1269 = vpack.c.b16 %v1256, %v1255
    %v1270 = vpack.c.b16 %v1258, %v1257
    %v1271 = vpack.c.b16 %v1260, %v1259
    %v1272 = vpack.c.b16 %v1262, %v1261
    %v1273 = vpack.c.b16 %v1264, %v1263
    %v1274 = vpack.c.b16 %v1266, %v1265
    %1283 = vmatprep.subr.bf16.mxu0 0
    %1284 = vmatpush1.bf16.msra.mxu0 %v1274
    %1285 = vmatprep.subr.bf16.mxu0 0
    %1286 = vmatpush1.bf16.msra.mxu0 %v1273
    %1287 = vmatprep.subr.bf16.mxu0 0
    %1288 = vmatpush1.bf16.msra.mxu0 %v1272
    %1289 = vmatprep.subr.bf16.mxu0 0
    %1290 = vmatpush1.bf16.msra.mxu0 %v1271
    %1291 = vmatprep.subr.bf16.mxu0 0
    %1292 = vmatpush1.bf16.msra.mxu0 %v1270
    %1293 = vmatprep.subr.bf16.mxu0 0
    %1294 = vmatpush1.bf16.msra.mxu0 %v1269
    %1295 = vmatprep.subr.bf16.mxu0 0
    %1296 = vmatpush1.bf16.msra.mxu0 %v1268
    %1297 = vmatprep.subr.bf16.mxu0 0
    %1298 = vmatpush1.bf16.msra.mxu0 %v1267
    %1299 = vmatprep.subr.bf16.mxu0 0
    %1300 = vmatpush2.bf16.msra.mxu0 0
    %1301 = vmatprep.subr.bf16.mxu0 0
    %1302 = vmatpush2.bf16.msra.mxu0 0
    %1303 = vmatprep.subr.bf16.mxu0 0
    %1304 = vmatpush2.bf16.msra.mxu0 0
    %1305 = vmatprep.subr.bf16.mxu0 0
    %1306 = vmatpush2.bf16.msra.mxu0 0
    %1307 = vmatprep.subr.bf16.mxu0 0
    %1308 = vmatpush2.bf16.msra.mxu0 0
    %1309 = vmatprep.subr.bf16.mxu0 0
    %1310 = vmatpush2.bf16.msra.mxu0 0
    %1311 = vmatprep.subr.bf16.mxu0 0
    %1312 = vmatpush2.bf16.msra.mxu0 0
    %1313 = vmatprep.subr.bf16.mxu0 0
    %1314 = vmatpush2.bf16.msra.mxu0 0
    %1315 = vmatprep.mubr.bf16.mxu0 0
    %1316 = vmatmul.mubr.bf16.gmra.mxu0 %v1211
    %v1317 = vpop.f32.mrf.mxu0
    %v1318 = vadd.f32 %v1233, %v1317
    %v1319 = vpop.f32.mrf.mxu0
    %v1320 = vpop.f32.mrf.mxu0
    %v1321 = vadd.f32 %v1233, %v1320
    %v1322 = vpop.f32.mrf.mxu0
    %1323 = vdwg.mxu0
    %1324 = vst [vmem:[#allocation13] sm:$0xff] %v1318
    %1325 = vst [vmem:[#allocation13 + $0x8] sm:$0xff] %v1321
    // Predicated region
    $region54: #{tpu_custom_call.1} parent=1 // pred_check
      _
    $region55: #{tpu_custom_call.1} parent=1 // pred_check_branch
      %1327 = sbr.rel (0) target = $region57
    $region56: #{tpu_custom_call.1} parent=1 // pred_region
      %s1329 = ssub.s32 256, 256
      %1330 = vsyncadd [#allocation4], %s1329
      %s1331 = sshll.u32 [#allocation13], 4
      %s1332 = int_to_ptr.vmem [resolvable:$true] %s1331
      %1337 = dma.vmem_to_hbm [thread:$0]  %s1332, 256, %s7, [#allocation4], 128, 128, 8
    $region57: #{tpu_custom_call.1} parent=1 // pred_fallthru
      _
    // Predicated region
    $region58: #{tpu_custom_call.1} parent=1 // pred_check
      _
    $region59: #{tpu_custom_call.1} parent=1 // pred_check_branch
      %1339 = sbr.rel (0) target = $region61
    $region60: #{tpu_custom_call.1} parent=1 // pred_region
      %1340 = dma.done [#allocation4], 256
    $region61: #{tpu_custom_call.1} parent=1 // pred_fallthru
      _
    %1341 = vsyncpa [#allocation3], 1
    %1342 = vsyncpa [#allocation6], 1
    %1343 = vsyncpa [#allocation9], 1
    %1344 = vsyncpa [#allocation12], 1
    %1345 = vsyncpa [#allocation4], 1

</llo_original>
